<compile_context>
chip_gen: v6e
topology: v6e:2x2x1
jax: 0.10.0
libtpu: 0.0.40
codegen_flags: <defaults>
</compile_context>

<pallas_src>
import functools

import jax
import jax.numpy as jnp
from jax.experimental import pallas as pl
from jax.experimental.pallas import tpu as pltpu


def conv1dnet_kernel(xw_ref, w1_ref, b1_ref, w2_ref, p_ref, o_ref, *,
                     k, halo, ts, eps):
    """One S-tile of the FFT conv block.

    xw_ref : [TS + 2*halo, Din]  x.dtype  halo'd input window (tile + 4 rows each side)
    w1_ref : [k*Din, Dinner]     bf16     conv1 weight, tap-major rows (k*Din + d)
    b1_ref : [1, Dinner]         f32      conv1 bias
    w2_ref : [Dinner, Din]       bf16     conv2 (1x1) weight
    p_ref  : [3, Din]            f32      rows = (conv2 bias, LN gamma, LN beta)
    o_ref  : [TS, Din]
    """
    xt = xw_ref[...]                                    # [TS+8, Din], x dtype (f32)

    # Rebuild the 9 conv taps with sublane-shifted slices (XLU work; the MXU
    # dominates at production shapes) and lane-concatenate so conv1 is a
    # single K = 9*Din contraction: cross-tap accumulation stays in the MXU.
    taps = [xt[t:t + ts, :] for t in range(k)]
    xs = jnp.concatenate([tp.astype(jnp.bfloat16) for tp in taps], axis=-1)

    # conv1 (kernel 9, pad 4): bf16 MXU operands, f32 accumulation.
    h = jnp.dot(xs, w1_ref[...], preferred_element_type=jnp.float32)
    h = jnp.maximum(h + b1_ref[...], 0.0)               # bias + ReLU, f32 epilogue

    # conv2 (kernel 1): plain matmul, bf16 operands, f32 accumulation.
    y = jnp.dot(h.astype(jnp.bfloat16), w2_ref[...],
                preferred_element_type=jnp.float32)

    p = p_ref[...]                                      # [3, Din]: (b2, gamma, beta)
    # dropout = identity at inference; residual = exact (f32) center tap.
    z = y + p[0:1, :] + taps[halo].astype(jnp.float32)

    # LayerNorm over features; two-pass statistics (better conditioned).
    mean = jnp.mean(z, axis=-1, keepdims=True)
    zc = z - mean
    var = jnp.mean(zc * zc, axis=-1, keepdims=True)
    o_ref[...] = (zc * jax.lax.rsqrt(var + eps) * p[1:2, :]
                  + p[2:3, :]).astype(o_ref.dtype)


def _round_up(x, m):
    return ((x + m - 1) // m) * m


def _vmem_limit_bytes():
    """Generation-aware VMEM budget (v7x: 64 MiB phys -> ~48 MiB; v5e/v6e: 128 -> 96)."""
    cap = 64 * 1024 * 1024                              # conservative fallback
    try:
        info = pltpu.get_tpu_info()
        cap = int(getattr(info, "vmem_capacity_bytes", cap))
    except Exception:
        pass
    return max(16 * 1024 * 1024, min(int(cap * 0.75), 100 * 1024 * 1024))


def _step_vmem_bytes(ts, din, dinner, k, x_bytes, out_bytes):
    """Estimated per-grid-step VMEM footprint."""
    win = 2 * (ts + k - 1) * din * x_bytes              # halo'd window, double-buffered
    out = 2 * ts * din * out_bytes                      # output tile, double-buffered
    wts = (k * din * dinner) * 2 + dinner * 4 + dinner * din * 2 + 3 * din * 4  # single-buffered
    inter = ts * k * din * 2 + ts * dinner * 4 + 3 * ts * din * 4               # xs + h + z/zc/y
    return win + out + wts + inter


def _pick_s_tile(s, din, dinner, k, x_bytes, out_bytes, budget):
    """Largest S-tile whose footprint fits the budget (candidates are 128/256-multiples)."""
    cap = _round_up(s, 8)
    cands = sorted({c for c in (cap, 1024, 512, 256, 128, 64, 32, 16, 8) if c <= cap},
                   reverse=True)
    for ts in cands:
        if _step_vmem_bytes(ts, din, dinner, k, x_bytes, out_bytes) <= budget:
            return ts
    return cands[-1]


def conv1dnet_forward(x, w1, b1, w2, b2, gamma, beta, *, eps=1e-5, out_dtype=None):
    """x: [B, S, Din]; w1: [9, Din, Dinner] (= torch conv1.weight[e,d,k] -> [k,d,e]);
    w2: [Dinner, Din] (= torch conv2.weight[d,e,0] -> [e,d]); b1/b2/gamma/beta: 1-D."""
    B, S, Din = x.shape
    K, Din_w, Dinner = w1.shape
    assert K == 9 and Din_w == Din
    halo = (K - 1) // 2                                  # 4

    out_dtype = x.dtype if out_dtype is None else out_dtype
    vmem_limit = _vmem_limit_bytes()
    ts = _pick_s_tile(S, Din, Dinner, K,
                      jnp.dtype(x.dtype).itemsize, jnp.dtype(out_dtype).itemsize,
                      budget=int(vmem_limit * 0.85))
    spad = _round_up(S, ts)
    n_t = spad // ts
    g = B * n_t

    # Pad once in HBM: conv halo (4 each side) + round S up to a tile multiple.
    xp = jnp.pad(x, ((0, 0), (halo, (spad - S) + halo), (0, 0)))
    # Per-tile halo'd windows [B, nT, TS+8, Din] -> [G, TS+8, Din]; ~(1+8/TS)x
    # of x (vs. the 9x im2col this replaces).  Kept in x.dtype so the residual
    # (center tap) stays full precision.
    xw = jnp.stack([xp[:, t * ts: t * ts + ts + 2 * halo, :] for t in range(n_t)],
                   axis=1).reshape(g, ts + 2 * halo, Din)

    w1u = w1.reshape(K * Din, Dinner).astype(jnp.bfloat16)   # tap-major rows k*Din+d
    w2b = w2.astype(jnp.bfloat16)
    b1r = b1.reshape(1, Dinner).astype(jnp.float32)
    params = jnp.stack([b2, gamma, beta], axis=0).astype(jnp.float32)   # [3, Din]

    kern = functools.partial(conv1dnet_kernel, k=K, halo=halo, ts=ts, eps=eps)

    def _const_spec(shape, single_buffer):
        idx = lambda i: (0,) * len(shape)
        if single_buffer:
            # Constant index map across the whole grid -> one buffer suffices.
            return pl.BlockSpec(shape, idx, pipeline_mode=pl.Buffered(1))
        return pl.BlockSpec(shape, idx)

    def _call(single_buffer_weights):
        wspec = lambda shape: _const_spec(shape, single_buffer_weights)
        return pl.pallas_call(
            kern,
            out_shape=jax.ShapeDtypeStruct((g, ts, Din), out_dtype),
            grid_spec=pltpu.PrefetchScalarGridSpec(
                num_scalar_prefetch=0,
                grid=(g,),
                in_specs=[
                    pl.BlockSpec((None, ts + 2 * halo, Din), lambda i: (i, 0, 0)),
                    wspec((K * Din, Dinner)),                 # w1 (unfolded)
                    wspec((1, Dinner)),                       # b1
                    wspec((Dinner, Din)),                     # w2
                    wspec((3, Din)),                          # b2 / gamma / beta
                ],
                out_specs=pl.BlockSpec((None, ts, Din), lambda i: (i, 0, 0)),
            ),
            compiler_params=pltpu.CompilerParams(
                dimension_semantics=("parallel",),
                vmem_limit_bytes=vmem_limit),
        )(xw, w1u, b1r, w2b, params)

    try:
        out = _call(True)
    except Exception:
        # pipeline_mode=pl.Buffered(1) unavailable on this jax build ->
        # fall back to default double-buffered weight specs.
        out = _call(False)

    out = out.reshape(B, spad, Din)
    return out[:, :S, :] if spad != S else out


if __name__ == "__main__":
    # Small shapes consistent with the module: x is [B, S, d_in]; inner_dim for conv1.
    B, S, Din, Dinner = 2, 32, 32, 64

    key = jax.random.PRNGKey(0)
    kx, kw1, kb1, kw2, kb2 = jax.random.split(key, 5)

    x = jax.random.normal(kx, (B, S, Din), dtype=jnp.float32)

    # Synthetic params mirroring the PyTorch parameter shapes:
    #   conv1.weight [Dinner, Din, 9] -> stored here as [9, Din, Dinner]
    #   conv2.weight [Din, Dinner, 1] -> stored here as [Dinner, Din]
    w1 = jax.random.normal(kw1, (9, Din, Dinner), dtype=jnp.float32) * 0.05
    b1 = jax.random.normal(kb1, (Dinner,), dtype=jnp.float32) * 0.05
    w2 = jax.random.normal(kw2, (Dinner, Din), dtype=jnp.float32) * 0.05
    b2 = jax.random.normal(kb2, (Din,), dtype=jnp.float32) * 0.05
    gamma = jnp.ones((Din,), jnp.float32)      # LayerNorm weight init
    beta = jnp.zeros((Din,), jnp.float32)      # LayerNorm bias init
    # nn.Dropout is identity in eval mode; implemented as identity.

    out = conv1dnet_forward(x, w1, b1, w2, b2, gamma, beta)
    out = jax.block_until_ready(out)
    assert out.shape == (B, S, Din)

    # Reference 1: exact module math in f32 (loose tol; kernel uses bf16 MXU operands).
    xpad = jnp.pad(x, ((0, 0), (4, 4), (0, 0)))
    conv1 = sum(jnp.einsum("bsd,de->bse", xpad[:, k:k + S, :], w1[k])
                for k in range(9)) + b1
    h = jnp.maximum(conv1, 0.0)
    y = jnp.einsum("bse,ed->bsd", h, w2) + b2
    z = y + x
    mu = jnp.mean(z, axis=-1, keepdims=True)
    var = jnp.mean((z - mu) ** 2, axis=-1, keepdims=True)
    ref_f32 = (z - mu) / jnp.sqrt(var + 1e-5) * gamma + beta
    assert jnp.allclose(out, ref_f32, atol=3e-2, rtol=3e-2), "mismatch vs f32 reference"

    # Reference 2: same math with bf16 matmul operands / f32 accumulation (tight tol).
    xs = jnp.concatenate([xpad[:, k:k + S, :] for k in range(9)],
                         axis=-1).astype(jnp.bfloat16)
    w1u = w1.reshape(9 * Din, Dinner).astype(jnp.bfloat16)
    h2 = jnp.maximum(
        jnp.einsum("bsf,fe->bse", xs, w1u,
                   preferred_element_type=jnp.float32) + b1, 0.0)
    y2 = jnp.einsum("bse,ed->bsd", h2.astype(jnp.bfloat16),
                    w2.astype(jnp.bfloat16),
                    preferred_element_type=jnp.float32) + b2
    z2 = y2 + x
    mu2 = jnp.mean(z2, axis=-1, keepdims=True)
    var2 = jnp.mean((z2 - mu2) ** 2, axis=-1, keepdims=True)
    ref_bf16 = (z2 - mu2) / jnp.sqrt(var2 + 1e-5) * gamma + beta
    assert jnp.allclose(out, ref_bf16, atol=2e-3, rtol=2e-3), "mismatch vs bf16 reference"

    print("KERNEL_OK")
</pallas_src>

<mosaic_0001>
module attributes {stable_mosaic.version = 11 : i64} {
  func.func @conv1dnet_kernel(%arg0: i32, %arg1: memref<1x40x32xf32, #tpu.memory_space<vmem>>, %arg2: memref<288x64xbf16, #tpu.memory_space<vmem>>, %arg3: memref<1x64xf32, #tpu.memory_space<vmem>>, %arg4: memref<64x32xbf16, #tpu.memory_space<vmem>>, %arg5: memref<3x32xf32, #tpu.memory_space<vmem>>, %arg6: memref<1x32x32xf32, #tpu.memory_space<vmem>>) attributes {dimension_semantics = [#tpu.dimension_semantics<parallel>], iteration_bounds = array<i64: 2>, scalar_prefetch = 0 : i64, scratch_operands = 0 : i64, tpu.core_type = #tpu.core_type<tc>, window_params = [{transform_indices = @transform_0, window_bounds = array<i64: 1, 40, 32>}, {pipeline_mode = #tpu.pipeline_mode<synchronous>, transform_indices = @transform_1, window_bounds = array<i64: 288, 64>}, {pipeline_mode = #tpu.pipeline_mode<synchronous>, transform_indices = @transform_2, window_bounds = array<i64: 1, 64>}, {pipeline_mode = #tpu.pipeline_mode<synchronous>, transform_indices = @transform_3, window_bounds = array<i64: 64, 32>}, {pipeline_mode = #tpu.pipeline_mode<synchronous>, transform_indices = @transform_4, window_bounds = array<i64: 3, 32>}, {transform_indices = @transform_5, window_bounds = array<i64: 1, 32, 32>}]} {
    %c0 = arith.constant 0 : index
    %c0_0 = arith.constant 0 : index
    %c0_1 = arith.constant 0 : index
    %0 = vector.load %arg1[%c0, %c0_0, %c0_1] : memref<1x40x32xf32, #tpu.memory_space<vmem>>, vector<1x40x32xf32>
    %1 = vector.shape_cast %0 : vector<1x40x32xf32> to vector<40x32xf32>
    %2 = vector.extract_strided_slice %1 {offsets = [0, 0], sizes = [32, 32], strides = [1, 1]} : vector<40x32xf32> to vector<32x32xf32>
    %3 = vector.extract_strided_slice %1 {offsets = [1, 0], sizes = [32, 32], strides = [1, 1]} : vector<40x32xf32> to vector<32x32xf32>
    %4 = vector.extract_strided_slice %1 {offsets = [2, 0], sizes = [32, 32], strides = [1, 1]} : vector<40x32xf32> to vector<32x32xf32>
    %5 = vector.extract_strided_slice %1 {offsets = [3, 0], sizes = [32, 32], strides = [1, 1]} : vector<40x32xf32> to vector<32x32xf32>
    %6 = vector.extract_strided_slice %1 {offsets = [4, 0], sizes = [32, 32], strides = [1, 1]} : vector<40x32xf32> to vector<32x32xf32>
    %7 = vector.extract_strided_slice %1 {offsets = [5, 0], sizes = [32, 32], strides = [1, 1]} : vector<40x32xf32> to vector<32x32xf32>
    %8 = vector.extract_strided_slice %1 {offsets = [6, 0], sizes = [32, 32], strides = [1, 1]} : vector<40x32xf32> to vector<32x32xf32>
    %9 = vector.extract_strided_slice %1 {offsets = [7, 0], sizes = [32, 32], strides = [1, 1]} : vector<40x32xf32> to vector<32x32xf32>
    %10 = vector.extract_strided_slice %1 {offsets = [8, 0], sizes = [32, 32], strides = [1, 1]} : vector<40x32xf32> to vector<32x32xf32>
    %11 = arith.truncf %2 : vector<32x32xf32> to vector<32x32xbf16>
    %12 = arith.truncf %3 : vector<32x32xf32> to vector<32x32xbf16>
    %13 = arith.truncf %4 : vector<32x32xf32> to vector<32x32xbf16>
    %14 = arith.truncf %5 : vector<32x32xf32> to vector<32x32xbf16>
    %15 = arith.truncf %6 : vector<32x32xf32> to vector<32x32xbf16>
    %16 = arith.truncf %7 : vector<32x32xf32> to vector<32x32xbf16>
    %17 = arith.truncf %8 : vector<32x32xf32> to vector<32x32xbf16>
    %18 = arith.truncf %9 : vector<32x32xf32> to vector<32x32xbf16>
    %19 = arith.truncf %10 : vector<32x32xf32> to vector<32x32xbf16>
    %20 = tpu.concatenate %11, %12, %13, %14, %15, %16, %17, %18, %19 in 1 : vector<32x32xbf16>, vector<32x32xbf16>, vector<32x32xbf16>, vector<32x32xbf16>, vector<32x32xbf16>, vector<32x32xbf16>, vector<32x32xbf16>, vector<32x32xbf16>, vector<32x32xbf16> -> vector<32x288xbf16>
    %c0_2 = arith.constant 0 : index
    %c0_3 = arith.constant 0 : index
    %21 = vector.load %arg2[%c0_2, %c0_3] : memref<288x64xbf16, #tpu.memory_space<vmem>>, vector<288x64xbf16>
    %cst = arith.constant dense<0.000000e+00> : vector<32x64xf32>
    %22 = tpu.matmul %20, %21, %cst {dimension_numbers = #tpu.dot_dimension_numbers<[1], [0], [0], [1], [0, 0, 1, 1], [], []>} : vector<32x288xbf16>, vector<288x64xbf16>, vector<32x64xf32> -> vector<32x64xf32>
    %c0_4 = arith.constant 0 : index
    %c0_5 = arith.constant 0 : index
    %23 = vector.load %arg3[%c0_4, %c0_5] : memref<1x64xf32, #tpu.memory_space<vmem>>, vector<1x64xf32>
    %24 = vector.broadcast %23 : vector<1x64xf32> to vector<32x64xf32>
    %25 = arith.addf %22, %24 : vector<32x64xf32>
    %cst_6 = arith.constant 0.000000e+00 : f32
    %26 = vector.broadcast %cst_6 : f32 to vector<32x64xf32>
    %27 = arith.maximumf %25, %26 : vector<32x64xf32>
    %28 = arith.truncf %27 : vector<32x64xf32> to vector<32x64xbf16>
    %c0_7 = arith.constant 0 : index
    %c0_8 = arith.constant 0 : index
    %29 = vector.load %arg4[%c0_7, %c0_8] : memref<64x32xbf16, #tpu.memory_space<vmem>>, vector<64x32xbf16>
    %cst_9 = arith.constant dense<0.000000e+00> : vector<32x32xf32>
    %30 = tpu.matmul %28, %29, %cst_9 {dimension_numbers = #tpu.dot_dimension_numbers<[1], [0], [0], [1], [0, 0, 1, 1], [], []>} : vector<32x64xbf16>, vector<64x32xbf16>, vector<32x32xf32> -> vector<32x32xf32>
    %c0_10 = arith.constant 0 : index
    %c0_11 = arith.constant 0 : index
    %31 = vector.load %arg5[%c0_10, %c0_11] : memref<3x32xf32, #tpu.memory_space<vmem>>, vector<3x32xf32>
    %32 = vector.extract_strided_slice %31 {offsets = [0, 0], sizes = [1, 32], strides = [1, 1]} : vector<3x32xf32> to vector<1x32xf32>
    %33 = vector.broadcast %32 : vector<1x32xf32> to vector<32x32xf32>
    %34 = arith.addf %30, %33 : vector<32x32xf32>
    %35 = arith.addf %34, %6 : vector<32x32xf32>
    %cst_12 = arith.constant dense<0.000000e+00> : vector<32xf32>
    %36 = vector.multi_reduction <add>, %35, %cst_12 [1] : vector<32x32xf32> to vector<32xf32>
    %37 = vector.shape_cast %36 : vector<32xf32> to vector<32x1xf32>
    %cst_13 = arith.constant 3.200000e+01 : f32
    %38 = vector.broadcast %cst_13 : f32 to vector<32x1xf32>
    %39 = arith.divf %37, %38 : vector<32x1xf32>
    %40 = vector.broadcast %39 : vector<32x1xf32> to vector<32x32xf32>
    %41 = arith.subf %35, %40 : vector<32x32xf32>
    %42 = arith.mulf %41, %41 : vector<32x32xf32>
    %cst_14 = arith.constant dense<0.000000e+00> : vector<32xf32>
    %43 = vector.multi_reduction <add>, %42, %cst_14 [1] : vector<32x32xf32> to vector<32xf32>
    %44 = vector.shape_cast %43 : vector<32xf32> to vector<32x1xf32>
    %cst_15 = arith.constant 3.200000e+01 : f32
    %45 = vector.broadcast %cst_15 : f32 to vector<32x1xf32>
    %46 = arith.divf %44, %45 : vector<32x1xf32>
    %cst_16 = arith.constant 9.99999974E-6 : f32
    %47 = vector.broadcast %cst_16 : f32 to vector<32x1xf32>
    %48 = arith.addf %46, %47 : vector<32x1xf32>
    %49 = math.rsqrt %48 : vector<32x1xf32>
    %50 = vector.broadcast %49 : vector<32x1xf32> to vector<32x32xf32>
    %51 = arith.mulf %41, %50 : vector<32x32xf32>
    %52 = vector.extract_strided_slice %31 {offsets = [1, 0], sizes = [1, 32], strides = [1, 1]} : vector<3x32xf32> to vector<1x32xf32>
    %53 = vector.broadcast %52 : vector<1x32xf32> to vector<32x32xf32>
    %54 = arith.mulf %51, %53 : vector<32x32xf32>
    %55 = vector.extract_strided_slice %31 {offsets = [2, 0], sizes = [1, 32], strides = [1, 1]} : vector<3x32xf32> to vector<1x32xf32>
    %56 = vector.broadcast %55 : vector<1x32xf32> to vector<32x32xf32>
    %57 = arith.addf %54, %56 : vector<32x32xf32>
    %c0_17 = arith.constant 0 : index
    %c0_18 = arith.constant 0 : index
    %c0_19 = arith.constant 0 : index
    %58 = vector.load %arg6[%c0_17, %c0_18, %c0_19] : memref<1x32x32xf32, #tpu.memory_space<vmem>>, vector<1x32x32xf32>
    %59 = vector.shape_cast %58 : vector<1x32x32xf32> to vector<32x32xf32>
    %60 = vector.shape_cast %57 : vector<32x32xf32> to vector<1x32x32xf32>
    tpu.vector_store %arg6[%c0_17, %c0_18, %c0_19], %60 {strides = array<i32>} : memref<1x32x32xf32, #tpu.memory_space<vmem>>, vector<1x32x32xf32>,
    return
  }
  func.func @transform_0(%arg0: i32) -> (i32, i32, i32) {
    %c0_i32 = arith.constant 0 : i32
    %c0_i32_0 = arith.constant 0 : i32
    %c0_i32_1 = arith.constant 0 : i32
    return %arg0, %c0_i32, %c0_i32_0 : i32, i32, i32
  }
  func.func @transform_1(%arg0: i32) -> (i32, i32) {
    %c0_i32 = arith.constant 0 : i32
    %c0_i32_0 = arith.constant 0 : i32
    %c0_i32_1 = arith.constant 0 : i32
    return %c0_i32, %c0_i32_0 : i32, i32
  }
  func.func @transform_2(%arg0: i32) -> (i32, i32) {
    %c0_i32 = arith.constant 0 : i32
    %c0_i32_0 = arith.constant 0 : i32
    %c0_i32_1 = arith.constant 0 : i32
    return %c0_i32, %c0_i32_0 : i32, i32
  }
  func.func @transform_3(%arg0: i32) -> (i32, i32) {
    %c0_i32 = arith.constant 0 : i32
    %c0_i32_0 = arith.constant 0 : i32
    %c0_i32_1 = arith.constant 0 : i32
    return %c0_i32, %c0_i32_0 : i32, i32
  }
  func.func @transform_4(%arg0: i32) -> (i32, i32) {
    %c0_i32 = arith.constant 0 : i32
    %c0_i32_0 = arith.constant 0 : i32
    %c0_i32_1 = arith.constant 0 : i32
    return %c0_i32, %c0_i32_0 : i32, i32
  }
  func.func @transform_5(%arg0: i32) -> (i32, i32, i32) {
    %c0_i32 = arith.constant 0 : i32
    %c0_i32_0 = arith.constant 0 : i32
    %c0_i32_1 = arith.constant 0 : i32
    return %arg0, %c0_i32, %c0_i32_0 : i32, i32, i32
  }
}

module attributes {stable_mosaic.version = 11 : i64} {
  func.func @conv1dnet_kernel(%arg0: i32, %arg1: memref<1x40x32xf32, #tpu.memory_space<vmem>>, %arg2: memref<288x64xbf16, #tpu.memory_space<vmem>>, %arg3: memref<1x64xf32, #tpu.memory_space<vmem>>, %arg4: memref<64x32xbf16, #tpu.memory_space<vmem>>, %arg5: memref<3x32xf32, #tpu.memory_space<vmem>>, %arg6: memref<1x32x32xf32, #tpu.memory_space<vmem>>) attributes {dimension_semantics = [#tpu.dimension_semantics<parallel>], iteration_bounds = array<i64: 2>, scalar_prefetch = 0 : i64, scratch_operands = 0 : i64, tpu.core_type = #tpu.core_type<tc>, window_params = [{transform_indices = @transform_0, window_bounds = array<i64: 1, 40, 32>}, {pipeline_mode = #tpu.pipeline_mode<synchronous>, transform_indices = @transform_1, window_bounds = array<i64: 288, 64>}, {pipeline_mode = #tpu.pipeline_mode<synchronous>, transform_indices = @transform_2, window_bounds = array<i64: 1, 64>}, {pipeline_mode = #tpu.pipeline_mode<synchronous>, transform_indices = @transform_3, window_bounds = array<i64: 64, 32>}, {pipeline_mode = #tpu.pipeline_mode<synchronous>, transform_indices = @transform_4, window_bounds = array<i64: 3, 32>}, {transform_indices = @transform_5, window_bounds = array<i64: 1, 32, 32>}]} {
    %c0 = arith.constant 0 : index
    %c0_0 = arith.constant 0 : index
    %c0_1 = arith.constant 0 : index
    %0 = vector.load %arg1[%c0, %c0_0, %c0_1] : memref<1x40x32xf32, #tpu.memory_space<vmem>>, vector<1x40x32xf32>
    %1 = vector.shape_cast %0 : vector<1x40x32xf32> to vector<40x32xf32>
    %2 = vector.extract_strided_slice %1 {offsets = [0, 0], sizes = [32, 32], strides = [1, 1]} : vector<40x32xf32> to vector<32x32xf32>
    %3 = vector.extract_strided_slice %1 {offsets = [1, 0], sizes = [32, 32], strides = [1, 1]} : vector<40x32xf32> to vector<32x32xf32>
    %4 = vector.extract_strided_slice %1 {offsets = [2, 0], sizes = [32, 32], strides = [1, 1]} : vector<40x32xf32> to vector<32x32xf32>
    %5 = vector.extract_strided_slice %1 {offsets = [3, 0], sizes = [32, 32], strides = [1, 1]} : vector<40x32xf32> to vector<32x32xf32>
    %6 = vector.extract_strided_slice %1 {offsets = [4, 0], sizes = [32, 32], strides = [1, 1]} : vector<40x32xf32> to vector<32x32xf32>
    %7 = vector.extract_strided_slice %1 {offsets = [5, 0], sizes = [32, 32], strides = [1, 1]} : vector<40x32xf32> to vector<32x32xf32>
    %8 = vector.extract_strided_slice %1 {offsets = [6, 0], sizes = [32, 32], strides = [1, 1]} : vector<40x32xf32> to vector<32x32xf32>
    %9 = vector.extract_strided_slice %1 {offsets = [7, 0], sizes = [32, 32], strides = [1, 1]} : vector<40x32xf32> to vector<32x32xf32>
    %10 = vector.extract_strided_slice %1 {offsets = [8, 0], sizes = [32, 32], strides = [1, 1]} : vector<40x32xf32> to vector<32x32xf32>
    %11 = arith.truncf %2 : vector<32x32xf32> to vector<32x32xbf16>
    %12 = arith.truncf %3 : vector<32x32xf32> to vector<32x32xbf16>
    %13 = arith.truncf %4 : vector<32x32xf32> to vector<32x32xbf16>
    %14 = arith.truncf %5 : vector<32x32xf32> to vector<32x32xbf16>
    %15 = arith.truncf %6 : vector<32x32xf32> to vector<32x32xbf16>
    %16 = arith.truncf %7 : vector<32x32xf32> to vector<32x32xbf16>
    %17 = arith.truncf %8 : vector<32x32xf32> to vector<32x32xbf16>
    %18 = arith.truncf %9 : vector<32x32xf32> to vector<32x32xbf16>
    %19 = arith.truncf %10 : vector<32x32xf32> to vector<32x32xbf16>
    %20 = tpu.concatenate %11, %12, %13, %14, %15, %16, %17, %18, %19 in 1 : vector<32x32xbf16>, vector<32x32xbf16>, vector<32x32xbf16>, vector<32x32xbf16>, vector<32x32xbf16>, vector<32x32xbf16>, vector<32x32xbf16>, vector<32x32xbf16>, vector<32x32xbf16> -> vector<32x288xbf16>
    %c0_2 = arith.constant 0 : index
    %c0_3 = arith.constant 0 : index
    %21 = vector.load %arg2[%c0_2, %c0_3] : memref<288x64xbf16, #tpu.memory_space<vmem>>, vector<288x64xbf16>
    %cst = arith.constant dense<0.000000e+00> : vector<32x64xf32>
    %22 = tpu.matmul %20, %21, %cst {dimension_numbers = #tpu.dot_dimension_numbers<[1], [0], [0], [1], [0, 0, 1, 1], [], []>} : vector<32x288xbf16>, vector<288x64xbf16>, vector<32x64xf32> -> vector<32x64xf32>
    %c0_4 = arith.constant 0 : index
    %c0_5 = arith.constant 0 : index
    %23 = vector.load %arg3[%c0_4, %c0_5] : memref<1x64xf32, #tpu.memory_space<vmem>>, vector<1x64xf32>
    %24 = vector.broadcast %23 : vector<1x64xf32> to vector<32x64xf32>
    %25 = arith.addf %22, %24 : vector<32x64xf32>
    %cst_6 = arith.constant 0.000000e+00 : f32
    %26 = vector.broadcast %cst_6 : f32 to vector<32x64xf32>
    %27 = arith.maximumf %25, %26 : vector<32x64xf32>
    %28 = arith.truncf %27 : vector<32x64xf32> to vector<32x64xbf16>
    %c0_7 = arith.constant 0 : index
    %c0_8 = arith.constant 0 : index
    %29 = vector.load %arg4[%c0_7, %c0_8] : memref<64x32xbf16, #tpu.memory_space<vmem>>, vector<64x32xbf16>
    %cst_9 = arith.constant dense<0.000000e+00> : vector<32x32xf32>
    %30 = tpu.matmul %28, %29, %cst_9 {dimension_numbers = #tpu.dot_dimension_numbers<[1], [0], [0], [1], [0, 0, 1, 1], [], []>} : vector<32x64xbf16>, vector<64x32xbf16>, vector<32x32xf32> -> vector<32x32xf32>
    %c0_10 = arith.constant 0 : index
    %c0_11 = arith.constant 0 : index
    %31 = vector.load %arg5[%c0_10, %c0_11] : memref<3x32xf32, #tpu.memory_space<vmem>>, vector<3x32xf32>
    %32 = vector.extract_strided_slice %31 {offsets = [0, 0], sizes = [1, 32], strides = [1, 1]} : vector<3x32xf32> to vector<1x32xf32>
    %33 = vector.broadcast %32 : vector<1x32xf32> to vector<32x32xf32>
    %34 = arith.addf %30, %33 : vector<32x32xf32>
    %35 = arith.addf %34, %6 : vector<32x32xf32>
    %cst_12 = arith.constant dense<0.000000e+00> : vector<32xf32>
    %36 = vector.multi_reduction <add>, %35, %cst_12 [1] : vector<32x32xf32> to vector<32xf32>
    %37 = vector.shape_cast %36 : vector<32xf32> to vector<32x1xf32>
    %cst_13 = arith.constant 3.200000e+01 : f32
    %38 = vector.broadcast %cst_13 : f32 to vector<32x1xf32>
    %39 = arith.divf %37, %38 : vector<32x1xf32>
    %40 = vector.broadcast %39 : vector<32x1xf32> to vector<32x32xf32>
    %41 = arith.subf %35, %40 : vector<32x32xf32>
    %42 = arith.mulf %41, %41 : vector<32x32xf32>
    %cst_14 = arith.constant dense<0.000000e+00> : vector<32xf32>
    %43 = vector.multi_reduction <add>, %42, %cst_14 [1] : vector<32x32xf32> to vector<32xf32>
    %44 = vector.shape_cast %43 : vector<32xf32> to vector<32x1xf32>
    %cst_15 = arith.constant 3.200000e+01 : f32
    %45 = vector.broadcast %cst_15 : f32 to vector<32x1xf32>
    %46 = arith.divf %44, %45 : vector<32x1xf32>
    %cst_16 = arith.constant 9.99999974E-6 : f32
    %47 = vector.broadcast %cst_16 : f32 to vector<32x1xf32>
    %48 = arith.addf %46, %47 : vector<32x1xf32>
    %49 = math.rsqrt %48 : vector<32x1xf32>
    %50 = vector.broadcast %49 : vector<32x1xf32> to vector<32x32xf32>
    %51 = arith.mulf %41, %50 : vector<32x32xf32>
    %52 = vector.extract_strided_slice %31 {offsets = [1, 0], sizes = [1, 32], strides = [1, 1]} : vector<3x32xf32> to vector<1x32xf32>
    %53 = vector.broadcast %52 : vector<1x32xf32> to vector<32x32xf32>
    %54 = arith.mulf %51, %53 : vector<32x32xf32>
    %55 = vector.extract_strided_slice %31 {offsets = [2, 0], sizes = [1, 32], strides = [1, 1]} : vector<3x32xf32> to vector<1x32xf32>
    %56 = vector.broadcast %55 : vector<1x32xf32> to vector<32x32xf32>
    %57 = arith.addf %54, %56 : vector<32x32xf32>
    %c0_17 = arith.constant 0 : index
    %c0_18 = arith.constant 0 : index
    %c0_19 = arith.constant 0 : index
    %58 = vector.load %arg6[%c0_17, %c0_18, %c0_19] : memref<1x32x32xf32, #tpu.memory_space<vmem>>, vector<1x32x32xf32>
    %59 = vector.shape_cast %58 : vector<1x32x32xf32> to vector<32x32xf32>
    %60 = vector.shape_cast %57 : vector<32x32xf32> to vector<1x32x32xf32>
    tpu.vector_store %arg6[%c0_17, %c0_18, %c0_19], %60 {strides = array<i32>} : memref<1x32x32xf32, #tpu.memory_space<vmem>>, vector<1x32x32xf32>,
    return
  }
  func.func @transform_0(%arg0: i32) -> (i32, i32, i32) {
    %c0_i32 = arith.constant 0 : i32
    %c0_i32_0 = arith.constant 0 : i32
    %c0_i32_1 = arith.constant 0 : i32
    return %arg0, %c0_i32, %c0_i32_0 : i32, i32, i32
  }
  func.func @transform_1(%arg0: i32) -> (i32, i32) {
    %c0_i32 = arith.constant 0 : i32
    %c0_i32_0 = arith.constant 0 : i32
    %c0_i32_1 = arith.constant 0 : i32
    return %c0_i32, %c0_i32_0 : i32, i32
  }
  func.func @transform_2(%arg0: i32) -> (i32, i32) {
    %c0_i32 = arith.constant 0 : i32
    %c0_i32_0 = arith.constant 0 : i32
    %c0_i32_1 = arith.constant 0 : i32
    return %c0_i32, %c0_i32_0 : i32, i32
  }
  func.func @transform_3(%arg0: i32) -> (i32, i32) {
    %c0_i32 = arith.constant 0 : i32
    %c0_i32_0 = arith.constant 0 : i32
    %c0_i32_1 = arith.constant 0 : i32
    return %c0_i32, %c0_i32_0 : i32, i32
  }
  func.func @transform_4(%arg0: i32) -> (i32, i32) {
    %c0_i32 = arith.constant 0 : i32
    %c0_i32_0 = arith.constant 0 : i32
    %c0_i32_1 = arith.constant 0 : i32
    return %c0_i32, %c0_i32_0 : i32, i32
  }
  func.func @transform_5(%arg0: i32) -> (i32, i32, i32) {
    %c0_i32 = arith.constant 0 : i32
    %c0_i32_0 = arith.constant 0 : i32
    %c0_i32_1 = arith.constant 0 : i32
    return %arg0, %c0_i32, %c0_i32_0 : i32, i32, i32
  }
}

</mosaic_0001>

<llo_original>
// kernel: tpu_custom_call.1
$region0: #{tpu_custom_call.1}
  #allocation0 [shape = 'u32[]', space=smem, size = 0x4, offset = 0x4, fixed_abs, tag = 'smem constant byte address 0x4 - core index']
  #allocation1 [shape = 'u32[144,128]{1,0:T(1,128)}', space=vmem, size = 0x12000, scoped, tag = 'internal scratch']
  %s0 = inlined_call_operand.vmem [shape: f32[2,40,32], index: 0, kind: input, shape index: {}]
  %s1 = inlined_call_operand.vmem [shape: bf16[288,64], index: 1, kind: input, shape index: {}]
  %s2 = inlined_call_operand.vmem [shape: f32[1,64], index: 2, kind: input, shape index: {}]
  %s3 = inlined_call_operand.vmem [shape: bf16[64,32], index: 3, kind: input, shape index: {}]
  %s4 = inlined_call_operand.vmem [shape: f32[3,32], index: 4, kind: input, shape index: {}]
  %s5 = inlined_call_operand.hbm [shape: f32[2,32,32], index: 5, kind: output, shape index: {}]
  %s6 = sld [smem:[#allocation0]]
  $region53: #{tpu_custom_call.1} parent=0
    _
  %s8 = ssub.s32 1, %s6
  %s9 = scalar_select 0, %s8, %s6
  $region1: #{tpu_custom_call.1} parent=0
    #allocation2 [shape = 'u8[32768]{0}', space=vmem, size = 0x8000, scoped, tag = 'output window, operand 0']
    #allocation3 [shape = 's32[2]{0}', space=sflag, size = 0x8, scoped, tag = 'scoped memory for tpu_custom_call.1']
    %10 = vsyncpa [#allocation3], 0
    %s11 = scalar_lea.sflag [#allocation3], 1
    %12 = vsyncpa %s11, 0
    loop: start=0, step=1, limit=4
    $region2: #{tpu_custom_call.1} parent=1 // loop_pre_header
      _
    $region3: #{tpu_custom_call.1} parent=1 // loop_header
      %s14 = sphi 0, %s18
      %p15 = scmp.ge.s32.totalorder %s14, 4
      %s24 = sphi 0, %s26
      %s27 = sphi 0, %s24
      %s28 = sphi 0, %s27
      %s44 = sphi 0, %s28
      %s48 = sphi 0, %s48
      %s50 = sphi 0, %s48
      %s51 = sphi 0, %s50
      %s65 = sphi 0, %s51
      %s69 = sphi 0, %s69
      %s71 = sphi 0, %s69
      %s72 = sphi 0, %s71
      %s86 = sphi 0, %s72
      %s90 = sphi 0, %s90
      %s92 = sphi 0, %s90
      %s93 = sphi 0, %s92
      %s107 = sphi 0, %s93
      %s111 = sphi 0, %s111
      %s113 = sphi 0, %s111
      %s114 = sphi 0, %s113
      %s128 = sphi 0, %s114
      %s134 = sphi 0, %s136
      %s137 = sphi 0, %s134
      %s138 = sphi 0, %s137
      %s154 = sphi 0, %s138
    $region4: #{tpu_custom_call.1} parent=1 // loop_header_branch
      %17 = sbr.rel (%p15) target = $region8
    $region5: #{tpu_custom_call.1} parent=1 // loop_body
      %s19 = ssub.s32 %s14, 1
      %s20 = ssub.s32 %s14, 2
      %s21 = sadd.s32 %s14, 1
      %s22 = ssub.s32 %s14, %s21
      %p23 = scmp.eq.s32.totalorder %s22, 0
      %s25 = sadd.s32 %s24, 1
      %s26 = scalar_select %p23, %s24, %s25
      %p29 = pneg %p23
      %p30 = scmp.eq.s32.totalorder %s14, 1
      %p31 = por %p29, %p30
      %p32 = scmp.ne.s32.totalorder %s24, %s27
      %p33 = scmp.eq.s32.totalorder %s14, 0
      %p34 = por %p32, %p33
      %p35 = scmp.ne.s32.totalorder %s24, %s27
      %p36 = scmp.eq.s32.totalorder %s19, 1
      %p37 = por %p35, %p36
      %p38 = scmp.ne.s32.totalorder %s27, %s28
      %p39 = scmp.eq.s32.totalorder %s19, 0
      %p40 = por %p38, %p39
      %p41 = scmp.ne.s32.totalorder %s27, %s28
      %p42 = scmp.eq.s32.totalorder %s20, 1
      %p43 = por %p41, %p42
      %p45 = scmp.ne.s32.totalorder %s28, %s44
      %p46 = scmp.eq.s32.totalorder %s20, 0
      %p47 = por %p45, %p46
      %s49 = sadd.s32 %s48, 1
      %p52 = scmp.eq.s32.totalorder %s14, 1
      %p53 = scmp.ne.s32.totalorder %s48, %s50
      %p54 = scmp.eq.s32.totalorder %s14, 0
      %p55 = por %p53, %p54
      %p56 = scmp.ne.s32.totalorder %s48, %s50
      %p57 = scmp.eq.s32.totalorder %s19, 1
      %p58 = por %p56, %p57
      %p59 = scmp.ne.s32.totalorder %s50, %s51
      %p60 = scmp.eq.s32.totalorder %s19, 0
      %p61 = por %p59, %p60
      %p62 = scmp.ne.s32.totalorder %s50, %s51
      %p63 = scmp.eq.s32.totalorder %s20, 1
      %p64 = por %p62, %p63
      %p66 = scmp.ne.s32.totalorder %s51, %s65
      %p67 = scmp.eq.s32.totalorder %s20, 0
      %p68 = por %p66, %p67
      %s70 = sadd.s32 %s69, 1
      %p73 = scmp.eq.s32.totalorder %s14, 1
      %p74 = scmp.ne.s32.totalorder %s69, %s71
      %p75 = scmp.eq.s32.totalorder %s14, 0
      %p76 = por %p74, %p75
      %p77 = scmp.ne.s32.totalorder %s69, %s71
      %p78 = scmp.eq.s32.totalorder %s19, 1
      %p79 = por %p77, %p78
      %p80 = scmp.ne.s32.totalorder %s71, %s72
      %p81 = scmp.eq.s32.totalorder %s19, 0
      %p82 = por %p80, %p81
      %p83 = scmp.ne.s32.totalorder %s71, %s72
      %p84 = scmp.eq.s32.totalorder %s20, 1
      %p85 = por %p83, %p84
      %p87 = scmp.ne.s32.totalorder %s72, %s86
      %p88 = scmp.eq.s32.totalorder %s20, 0
      %p89 = por %p87, %p88
      %s91 = sadd.s32 %s90, 1
      %p94 = scmp.eq.s32.totalorder %s14, 1
      %p95 = scmp.ne.s32.totalorder %s90, %s92
      %p96 = scmp.eq.s32.totalorder %s14, 0
      %p97 = por %p95, %p96
      %p98 = scmp.ne.s32.totalorder %s90, %s92
      %p99 = scmp.eq.s32.totalorder %s19, 1
      %p100 = por %p98, %p99
      %p101 = scmp.ne.s32.totalorder %s92, %s93
      %p102 = scmp.eq.s32.totalorder %s19, 0
      %p103 = por %p101, %p102
      %p104 = scmp.ne.s32.totalorder %s92, %s93
      %p105 = scmp.eq.s32.totalorder %s20, 1
      %p106 = por %p104, %p105
      %p108 = scmp.ne.s32.totalorder %s93, %s107
      %p109 = scmp.eq.s32.totalorder %s20, 0
      %p110 = por %p108, %p109
      %s112 = sadd.s32 %s111, 1
      %p115 = scmp.eq.s32.totalorder %s14, 1
      %p116 = scmp.ne.s32.totalorder %s111, %s113
      %p117 = scmp.eq.s32.totalorder %s14, 0
      %p118 = por %p116, %p117
      %p119 = scmp.ne.s32.totalorder %s111, %s113
      %p120 = scmp.eq.s32.totalorder %s19, 1
      %p121 = por %p119, %p120
      %p122 = scmp.ne.s32.totalorder %s113, %s114
      %p123 = scmp.eq.s32.totalorder %s19, 0
      %p124 = por %p122, %p123
      %p125 = scmp.ne.s32.totalorder %s113, %s114
      %p126 = scmp.eq.s32.totalorder %s20, 1
      %p127 = por %p125, %p126
      %p129 = scmp.ne.s32.totalorder %s114, %s128
      %p130 = scmp.eq.s32.totalorder %s20, 0
      %p131 = por %p129, %p130
      %s132 = ssub.s32 %s14, %s21
      %p133 = scmp.eq.s32.totalorder %s132, 0
      %s135 = sadd.s32 %s134, 1
      %s136 = scalar_select %p133, %s134, %s135
      %p139 = pneg %p133
      %p140 = scmp.eq.s32.totalorder %s14, 1
      %p141 = por %p139, %p140
      %p142 = scmp.ne.s32.totalorder %s134, %s137
      %p143 = scmp.eq.s32.totalorder %s14, 0
      %p144 = por %p142, %p143
      %p145 = scmp.ne.s32.totalorder %s134, %s137
      %p146 = scmp.eq.s32.totalorder %s19, 1
      %p147 = por %p145, %p146
      %p148 = scmp.ne.s32.totalorder %s137, %s138
      %p149 = scmp.eq.s32.totalorder %s19, 0
      %p150 = por %p148, %p149
      %p151 = scmp.ne.s32.totalorder %s137, %s138
      %p152 = scmp.eq.s32.totalorder %s20, 1
      %p153 = por %p151, %p152
      %p155 = scmp.ne.s32.totalorder %s138, %s154
      %p156 = scmp.eq.s32.totalorder %s20, 0
      %p157 = por %p155, %p156
      %p158 = scmp.le.s32.totalorder 1, %s14
      %p159 = scmp.lt.s32.totalorder %s14, 3
      %p160 = pnand %p158, %p159
      %p161 = pneg %p160
      // Predicated region
      $region9: #{tpu_custom_call.1} parent=5 // pred_check
        _
      $region10: #{tpu_custom_call.1} parent=5 // pred_check_branch
        %163 = sbr.rel (%p160) target = $region12
      $region11: #{tpu_custom_call.1} parent=5 // pred_region
        %s164 = ssub.s32 %s14, 1
        // Predicated region
        $region13: #{tpu_custom_call.1} parent=11 // pred_check
          %p165 = pneg %p61
        $region14: #{tpu_custom_call.1} parent=11 // pred_check_branch
          %167 = sbr.rel (%p165) target = $region16
        $region15: #{tpu_custom_call.1} parent=11 // pred_region
          _
        $region16: #{tpu_custom_call.1} parent=11 // pred_fallthru
          _
        // Predicated region
        $region17: #{tpu_custom_call.1} parent=11 // pred_check
          %p168 = pneg %p82
        $region18: #{tpu_custom_call.1} parent=11 // pred_check_branch
          %170 = sbr.rel (%p168) target = $region20
        $region19: #{tpu_custom_call.1} parent=11 // pred_region
          _
        $region20: #{tpu_custom_call.1} parent=11 // pred_fallthru
          _
        // Predicated region
        $region21: #{tpu_custom_call.1} parent=11 // pred_check
          %p171 = pneg %p103
        $region22: #{tpu_custom_call.1} parent=11 // pred_check_branch
          %173 = sbr.rel (%p171) target = $region24
        $region23: #{tpu_custom_call.1} parent=11 // pred_region
          _
        $region24: #{tpu_custom_call.1} parent=11 // pred_fallthru
          _
        // Predicated region
        $region25: #{tpu_custom_call.1} parent=11 // pred_check
          %p174 = pneg %p124
        $region26: #{tpu_custom_call.1} parent=11 // pred_check_branch
          %176 = sbr.rel (%p174) target = $region28
        $region27: #{tpu_custom_call.1} parent=11 // pred_region
          _
        $region28: #{tpu_custom_call.1} parent=11 // pred_fallthru
          _
      $region12: #{tpu_custom_call.1} parent=5 // pred_fallthru
        _
      %p177 = scmp.lt.s32.totalorder %s14, 2
      // Predicated region
      $region29: #{tpu_custom_call.1} parent=5 // pred_check
        %p178 = pneg %p177
      $region30: #{tpu_custom_call.1} parent=5 // pred_check_branch
        %180 = sbr.rel (%p178) target = $region32
      $region31: #{tpu_custom_call.1} parent=5 // pred_region
        // Predicated region
        $region33: #{tpu_custom_call.1} parent=31 // pred_check
          %p181 = pneg %p34
        $region34: #{tpu_custom_call.1} parent=31 // pred_check_branch
          %183 = sbr.rel (%p181) target = $region36
        $region35: #{tpu_custom_call.1} parent=31 // pred_region
          %p184 = scmp.lt.s32.totalorder %s14, 1
          %s185 = scalar_select %p184, %s14, 1
          %s186 = smul.addr %s185, 5
          %s187 = smul.addr %s186, 8
          %s188 = scalar_lea.vmem %s0, %s187
        $region36: #{tpu_custom_call.1} parent=31 // pred_fallthru
          _
      $region32: #{tpu_custom_call.1} parent=5 // pred_fallthru
        _
      %p189 = scmp.le.s32.totalorder 1, %s14
      %p190 = scmp.lt.s32.totalorder %s14, 3
      %p191 = pnand %p189, %p190
      %p192 = pneg %p191
      // Predicated region
      $region37: #{tpu_custom_call.1} parent=5 // pred_check
        _
      $region38: #{tpu_custom_call.1} parent=5 // pred_check_branch
        %194 = sbr.rel (%p191) target = $region40
      $region39: #{tpu_custom_call.1} parent=5 // pred_region
        %s195 = ssub.s32 %s14, 1
        %p196 = scmp.lt.s32.totalorder %s19, 1
        %s197 = scalar_select %p196, %s19, 1
        %s198 = smul.addr %s197, 5
        %s199 = smul.addr %s198, 8
        %s200 = scalar_lea.vmem %s0, %s199
        %p201 = pneg %p40
        %p202 = pneg %p37
        %p203 = pneg %p61
        %p204 = pneg %p58
        %p205 = pneg %p82
        %p206 = pneg %p79
        %p207 = pneg %p103
        %p208 = pneg %p100
        %p209 = pneg %p124
        %p210 = pneg %p121
        %p211 = pneg %p150
        %p212 = pneg %p147
        %s213 = sand.u32 %s137, 1
        %s214 = scalar_lea.sflag [#allocation3], %s213
        %s215 = sand.u32 %s137, 1
        %s216 = smul.addr %s215, 32
        %s217 = scalar_lea.vmem [#allocation2], %s216
        %p218 = scmp.lt.s32.totalorder %s19, 1
        %s219 = scalar_select %p218, %s19, 1
        %s220 = smul.addr %s219, 5
        %s221 = smul.addr %s220, 8
        %s222 = scalar_lea.vmem %s0, %s221
        %v224 = vld [vmem:[%s222] sm:$0xff]
        %v225 = vld [vmem:[%s222 + $0x8] sm:$0xff]
        %v226 = vld [vmem:[%s222 + $0x10] sm:$0xff]
        %v227 = vld [vmem:[%s222 + $0x18] sm:$0xff]
        %v228 = vld [vmem:[%s222 + $0x20] sm:$0xff]
        %v229 = vpack.c.bf16 %v225, %v224
        %v230 = vpack.c.bf16 %v227, %v226
        %v231 = vpack.c.bf16 %v228, %v228
        %v232 = vpack.c.bf16 %v226, %v225
        %v233 = vpack.c.bf16 %v228, %v227
        %vm234 = vsmask.f32 7424
        %v236 = vshrl.u32 %v229, 16
        %v238 = vshll.u32 %v229, 16
        %v240 = vrot.slane %v238, 1
        %v241 = vor.u32 %v236, %v240
        %v243 = vshll.u32 %v230, 16
        %v245 = vrot.slane %v243, 1
        %v246 = vsel %vm234, %v241, %v245
        %v247 = vshrl.u32 %v230, 16
        %v249 = vor.u32 %v247, %v245
        %v251 = vshll.u32 %v231, 16
        %v253 = vrot.slane %v251, 1
        %v254 = vsel %vm234, %v249, %v253
        %255 = vrot.lane.b32.xlu0 %v246, 32
        %v256 = vpop.permute.xlu0 %255
        %257 = vrot.lane.b32.xlu0 %v254, 32
        %v258 = vpop.permute.xlu0 %257
        %vm262 = vcmask 1046528
        %v263 = vrot.slane %v229, 1
        %v264 = vrot.slane %v230, 1
        %v265 = vsel %vm262, %v263, %v264
        %v266 = vrot.slane %v231, 1
        %v267 = vsel %vm262, %v264, %v266
        %268 = vrot.lane.b32.xlu0 %v265, 64
        %v269 = vpop.permute.xlu0 %268
        %270 = vrot.lane.b32.xlu0 %v267, 64
        %v271 = vpop.permute.xlu0 %270
        %vm272 = vsmask.f32 6400
        %v273 = vrot.slane %v236, 1
        %v274 = vrot.slane %v238, 2
        %v275 = vor.u32 %v273, %v274
        %v276 = vrot.slane %v247, 1
        %v277 = vrot.slane %v243, 2
        %v278 = vor.u32 %v276, %v277
        %v279 = vsel %vm272, %v275, %v278
        %v280 = vshrl.u32 %v231, 16
        %v282 = vrot.slane %v280, 1
        %v283 = vrot.slane %v251, 2
        %v284 = vor.u32 %v282, %v283
        %v285 = vsel %vm272, %v278, %v284
        %286 = vrot.lane.b32.xlu0 %v279, 96
        %v287 = vpop.permute.xlu0 %286
        %288 = vrot.lane.b32.xlu0 %v285, 96
        %v289 = vpop.permute.xlu0 %288
        %vm290 = vcmask 1045504
        %v291 = vrot.slane %v229, 2
        %v292 = vrot.slane %v230, 2
        %v293 = vsel %vm290, %v291, %v292
        %v294 = vrot.slane %v231, 2
        %v295 = vsel %vm290, %v292, %v294
        %vm296 = vsmask.f32 5376
        %v297 = vrot.slane %v236, 2
        %v298 = vrot.slane %v238, 3
        %v299 = vor.u32 %v297, %v298
        %v300 = vrot.slane %v247, 2
        %v301 = vrot.slane %v243, 3
        %v302 = vor.u32 %v300, %v301
        %v303 = vsel %vm296, %v299, %v302
        %v304 = vrot.slane %v280, 2
        %v305 = vrot.slane %v251, 3
        %v306 = vor.u32 %v304, %v305
        %v307 = vsel %vm296, %v302, %v306
        %308 = vrot.lane.b32.xlu0 %v303, 32
        %v309 = vpop.permute.xlu0 %308
        %310 = vrot.lane.b32.xlu0 %v307, 32
        %v311 = vpop.permute.xlu0 %310
        %vm312 = vcmask 1044480
        %v313 = vrot.slane %v229, 3
        %v314 = vrot.slane %v230, 3
        %v315 = vsel %vm312, %v313, %v314
        %v316 = vrot.slane %v231, 3
        %v317 = vsel %vm312, %v314, %v316
        %318 = vrot.lane.b32.xlu0 %v315, 64
        %v319 = vpop.permute.xlu0 %318
        %320 = vrot.lane.b32.xlu0 %v317, 64
        %v321 = vpop.permute.xlu0 %320
        %vm322 = vsmask.f32 4352
        %v323 = vrot.slane %v236, 3
        %v324 = vrot.slane %v238, 4
        %v325 = vor.u32 %v323, %v324
        %v326 = vrot.slane %v247, 3
        %v327 = vrot.slane %v243, 4
        %v328 = vor.u32 %v326, %v327
        %v329 = vsel %vm322, %v325, %v328
        %v330 = vrot.slane %v280, 3
        %v331 = vrot.slane %v251, 4
        %v332 = vor.u32 %v330, %v331
        %v333 = vsel %vm322, %v328, %v332
        %334 = vrot.lane.b32.xlu0 %v329, 96
        %v335 = vpop.permute.xlu0 %334
        %336 = vrot.lane.b32.xlu0 %v333, 96
        %v337 = vpop.permute.xlu0 %336
        %vm338 = vcmask 261120
        %v340 = vsel %vm338, %v229, %v256
        %v342 = vsel %vm338, %v230, %v258
        %vm343 = vcmask 523264
        %v345 = vsel %vm343, %v340, %v269
        %v347 = vsel %vm343, %v342, %v271
        %vm348 = vcmask 785408
        %v350 = vsel %vm348, %v345, %v287
        %v353 = vsel %vm348, %v347, %v289
        %v357 = vsel %vm338, %v293, %v309
        %v360 = vsel %vm338, %v295, %v311
        %v362 = vsel %vm343, %v357, %v319
        %v364 = vsel %vm343, %v360, %v321
        %v366 = vsel %vm348, %v362, %v335
        %v369 = vsel %vm348, %v364, %v337
        %v371 = vld [vmem:[%s1] sm:$0xf]
        %v372 = vld [vmem:[%s1 + $0x4] sm:$0xf]
        %v373 = vld [vmem:[%s1 + $0x8] sm:$0xf]
        %v374 = vld [vmem:[%s1 + $0xc] sm:$0xf]
        %v375 = vld [vmem:[%s1 + $0x10] sm:$0xf]
        %v376 = vld [vmem:[%s1 + $0x14] sm:$0xf]
        %v377 = vld [vmem:[%s1 + $0x18] sm:$0xf]
        %v378 = vld [vmem:[%s1 + $0x1c] sm:$0xf]
        %v379 = vld [vmem:[%s1 + $0x20] sm:$0xf]
        %v380 = vld [vmem:[%s1 + $0x24] sm:$0xf]
        %v381 = vld [vmem:[%s1 + $0x28] sm:$0xf]
        %v382 = vld [vmem:[%s1 + $0x2c] sm:$0xf]
        %v383 = vld [vmem:[%s1 + $0x30] sm:$0xf]
        %v384 = vld [vmem:[%s1 + $0x34] sm:$0xf]
        %v385 = vld [vmem:[%s1 + $0x38] sm:$0xf]
        %v386 = vld [vmem:[%s1 + $0x3c] sm:$0xf]
        %v387 = vld [vmem:[%s1 + $0x40] sm:$0xf]
        %v388 = vld [vmem:[%s1 + $0x44] sm:$0xf]
        %v389 = vld [vmem:[%s1 + $0x48] sm:$0xf]
        %v390 = vld [vmem:[%s1 + $0x4c] sm:$0xf]
        %v391 = vld [vmem:[%s1 + $0x50] sm:$0xf]
        %v392 = vld [vmem:[%s1 + $0x54] sm:$0xf]
        %v393 = vld [vmem:[%s1 + $0x58] sm:$0xf]
        %v394 = vld [vmem:[%s1 + $0x5c] sm:$0xf]
        %v395 = vld [vmem:[%s1 + $0x60] sm:$0xf]
        %v396 = vld [vmem:[%s1 + $0x64] sm:$0xf]
        %v397 = vld [vmem:[%s1 + $0x68] sm:$0xf]
        %v398 = vld [vmem:[%s1 + $0x6c] sm:$0xf]
        %v399 = vld [vmem:[%s1 + $0x70] sm:$0xf]
        %v400 = vld [vmem:[%s1 + $0x74] sm:$0xf]
        %v401 = vld [vmem:[%s1 + $0x78] sm:$0xf]
        %v402 = vld [vmem:[%s1 + $0x7c] sm:$0xf]
        %v403 = vld [vmem:[%s1 + $0x80] sm:$0xf]
        %v404 = vld [vmem:[%s1 + $0x84] sm:$0xf]
        %v405 = vld [vmem:[%s1 + $0x88] sm:$0xf]
        %v406 = vld [vmem:[%s1 + $0x8c] sm:$0xf]
        %v407 = vld [vmem:[%s2] sm:$0x1]
        %v409 = vlaneseq
        %v410 = vshrl.u32 %v409, 7
        %v411 = vsub.s32 0, %v410
        %v412 = vrot.slane %v407, %v411
        %v450 = vunpack.c.l.b16 %v371
        %v451 = vunpack.c.l.b16 %v372
        %v452 = vunpack.c.l.b16 %v373
        %v453 = vunpack.c.l.b16 %v374
        %v454 = vunpack.c.l.b16 %v375
        %v455 = vunpack.c.l.b16 %v376
        %v456 = vunpack.c.l.b16 %v377
        %v457 = vunpack.c.l.b16 %v378
        %v458 = vunpack.c.l.b16 %v379
        %v459 = vunpack.c.l.b16 %v380
        %v460 = vunpack.c.l.b16 %v381
        %v461 = vunpack.c.l.b16 %v382
        %v462 = vunpack.c.l.b16 %v383
        %v463 = vunpack.c.l.b16 %v384
        %v464 = vunpack.c.l.b16 %v385
        %v465 = vunpack.c.l.b16 %v386
        %v466 = vunpack.c.l.b16 %v387
        %v467 = vunpack.c.l.b16 %v388
        %v468 = vunpack.c.l.b16 %v389
        %v469 = vunpack.c.l.b16 %v390
        %v470 = vunpack.c.l.b16 %v391
        %v471 = vunpack.c.l.b16 %v392
        %v472 = vunpack.c.l.b16 %v393
        %v473 = vunpack.c.l.b16 %v394
        %v474 = vunpack.c.l.b16 %v395
        %v475 = vunpack.c.l.b16 %v396
        %v476 = vunpack.c.l.b16 %v397
        %v477 = vunpack.c.l.b16 %v398
        %v478 = vunpack.c.l.b16 %v399
        %v479 = vunpack.c.l.b16 %v400
        %v480 = vunpack.c.l.b16 %v401
        %v481 = vunpack.c.l.b16 %v402
        %v482 = vunpack.c.l.b16 %v403
        %v483 = vunpack.c.l.b16 %v404
        %v484 = vunpack.c.l.b16 %v405
        %v485 = vunpack.c.l.b16 %v406
        %v486 = vpack.c.b16 %v451, %v450
        %v487 = vpack.c.b16 %v453, %v452
        %v488 = vpack.c.b16 %v455, %v454
        %v489 = vpack.c.b16 %v457, %v456
        %v490 = vpack.c.b16 %v459, %v458
        %v491 = vpack.c.b16 %v461, %v460
        %v492 = vpack.c.b16 %v463, %v462
        %v493 = vpack.c.b16 %v465, %v464
        %v494 = vpack.c.b16 %v467, %v466
        %v495 = vpack.c.b16 %v469, %v468
        %v496 = vpack.c.b16 %v471, %v470
        %v497 = vpack.c.b16 %v473, %v472
        %v498 = vpack.c.b16 %v475, %v474
        %v499 = vpack.c.b16 %v477, %v476
        %v500 = vpack.c.b16 %v479, %v478
        %v501 = vpack.c.b16 %v481, %v480
        %v502 = vpack.c.b16 %v483, %v482
        %v503 = vpack.c.b16 %v485, %v484
        %v523 = vsel %vm338, %v232, 0
        %v526 = vsel %vm338, %v233, 0
        %528 = vmatprep.subr.bf16.mxu0 0
        %529 = vmatpush1.bf16.msra.mxu0 %v493
        %530 = vmatprep.subr.bf16.mxu0 0
        %531 = vmatpush1.bf16.msra.mxu0 %v492
        %532 = vmatprep.subr.bf16.mxu0 0
        %533 = vmatpush1.bf16.msra.mxu0 %v491
        %534 = vmatprep.subr.bf16.mxu0 0
        %535 = vmatpush1.bf16.msra.mxu0 %v490
        %536 = vmatprep.subr.bf16.mxu0 0
        %537 = vmatpush1.bf16.msra.mxu0 %v489
        %538 = vmatprep.subr.bf16.mxu0 0
        %539 = vmatpush1.bf16.msra.mxu0 %v488
        %540 = vmatprep.subr.bf16.mxu0 0
        %541 = vmatpush1.bf16.msra.mxu0 %v487
        %542 = vmatprep.subr.bf16.mxu0 0
        %543 = vmatpush1.bf16.msra.mxu0 %v486
        %544 = vmatprep.subr.bf16.mxu0 0
        %545 = vmatpush2.bf16.msra.mxu0 %v501
        %546 = vmatprep.subr.bf16.mxu0 0
        %547 = vmatpush2.bf16.msra.mxu0 %v500
        %548 = vmatprep.subr.bf16.mxu0 0
        %549 = vmatpush2.bf16.msra.mxu0 %v499
        %550 = vmatprep.subr.bf16.mxu0 0
        %551 = vmatpush2.bf16.msra.mxu0 %v498
        %552 = vmatprep.subr.bf16.mxu0 0
        %553 = vmatpush2.bf16.msra.mxu0 %v497
        %554 = vmatprep.subr.bf16.mxu0 0
        %555 = vmatpush2.bf16.msra.mxu0 %v496
        %556 = vmatprep.subr.bf16.mxu0 0
        %557 = vmatpush2.bf16.msra.mxu0 %v495
        %558 = vmatprep.subr.bf16.mxu0 0
        %559 = vmatpush2.bf16.msra.mxu0 %v494
        %560 = vmatprep.mubr.bf16.mxu0 %v366
        %561 = vmatmul.mubr.bf16.gmra.mxu0 %v350
        %v562 = vpop.f32.mrf.mxu0
        %v563 = vadd.f32 %v412, %v562
        %v564 = vpop.f32.mrf.mxu0
        %v565 = vpop.f32.mrf.mxu0
        %v566 = vadd.f32 %v412, %v565
        %v567 = vpop.f32.mrf.mxu0
        %568 = vmatprep.mubr.bf16.mxu0 %v369
        %569 = vmatmul.mubr.bf16.gmra.mxu0 %v353
        %v570 = vpop.f32.mrf.mxu0
        %v571 = vadd.f32 %v412, %v570
        %v572 = vpop.f32.mrf.mxu0
        %v573 = vpop.f32.mrf.mxu0
        %v574 = vadd.f32 %v412, %v573
        %v575 = vpop.f32.mrf.mxu0
        %576 = vdwg.mxu0
        %577 = vmatprep.subr.bf16.mxu0 0
        %578 = vmatpush1.bf16.msra.mxu0 0
        %579 = vmatprep.subr.bf16.mxu0 0
        %580 = vmatpush1.bf16.msra.mxu0 0
        %581 = vmatprep.subr.bf16.mxu0 0
        %582 = vmatpush1.bf16.msra.mxu0 0
        %583 = vmatprep.subr.bf16.mxu0 0
        %584 = vmatpush1.bf16.msra.mxu0 0
        %585 = vmatprep.subr.bf16.mxu0 0
        %586 = vmatpush1.bf16.msra.mxu0 0
        %587 = vmatprep.subr.bf16.mxu0 0
        %588 = vmatpush1.bf16.msra.mxu0 0
        %589 = vmatprep.subr.bf16.mxu0 0
        %590 = vmatpush1.bf16.msra.mxu0 %v503
        %591 = vmatprep.subr.bf16.mxu0 0
        %592 = vmatpush1.bf16.msra.mxu0 %v502
        %593 = vmatprep.subr.bf16.mxu0 0
        %594 = vmatpush2.bf16.msra.mxu0 0
        %595 = vmatprep.subr.bf16.mxu0 0
        %596 = vmatpush2.bf16.msra.mxu0 0
        %597 = vmatprep.subr.bf16.mxu0 0
        %598 = vmatpush2.bf16.msra.mxu0 0
        %599 = vmatprep.subr.bf16.mxu0 0
        %600 = vmatpush2.bf16.msra.mxu0 0
        %601 = vmatprep.subr.bf16.mxu0 0
        %602 = vmatpush2.bf16.msra.mxu0 0
        %603 = vmatprep.subr.bf16.mxu0 0
        %604 = vmatpush2.bf16.msra.mxu0 0
        %605 = vmatprep.subr.bf16.mxu0 0
        %606 = vmatpush2.bf16.msra.mxu0 0
        %607 = vmatprep.subr.bf16.mxu0 0
        %608 = vmatpush2.bf16.msra.mxu0 0
        %609 = vmatprep.mubr.bf16.mxu0 0
        %610 = vmatmul.mubr.bf16.gmra.mxu0 %v523
        %v611 = vpop.f32.mrf.mxu0
        %v612 = vadd.f32 %v563, %v611
        %v613 = vpop.f32.mrf.mxu0
        %v614 = vpop.f32.mrf.mxu0
        %v615 = vadd.f32 %v566, %v614
        %v616 = vpop.f32.mrf.mxu0
        %617 = vmatprep.mubr.bf16.mxu0 0
        %618 = vmatmul.mubr.bf16.gmra.mxu0 %v526
        %v619 = vpop.f32.mrf.mxu0
        %v620 = vadd.f32 %v571, %v619
        %v621 = vpop.f32.mrf.mxu0
        %v622 = vpop.f32.mrf.mxu0
        %v623 = vadd.f32 %v574, %v622
        %v624 = vpop.f32.mrf.mxu0
        %625 = vdwg.mxu0
        %v626 = vmax.f32 %v612, 0.0
        %v627 = vmax.f32 %v615, 0.0
        %v628 = vmax.f32 %v620, 0.0
        %v629 = vmax.f32 %v623, 0.0
        %v630 = vpack.c.bf16 %v627, %v626
        %v631 = vpack.c.bf16 %v629, %v628
        %v632 = vld [vmem:[%s3] sm:$0xf]
        %v633 = vld [vmem:[%s3 + $0x4] sm:$0xf]
        %v634 = vld [vmem:[%s3 + $0x8] sm:$0xf]
        %v635 = vld [vmem:[%s3 + $0xc] sm:$0xf]
        %v636 = vld [vmem:[%s3 + $0x10] sm:$0xf]
        %v637 = vld [vmem:[%s3 + $0x14] sm:$0xf]
        %v638 = vld [vmem:[%s3 + $0x18] sm:$0xf]
        %v639 = vld [vmem:[%s3 + $0x1c] sm:$0xf]
        %v640 = vld [vmem:[%s4] sm:$0x7]
        %v641 = vlaneseq
        %v642 = vshrl.u32 %v641, 7
        %v643 = vsub.s32 0, %v642
        %v644 = vrot.slane %v640, %v643
        %v653 = vunpack.c.l.b16 %v632
        %v654 = vunpack.c.l.b16 %v633
        %v655 = vunpack.c.l.b16 %v634
        %v656 = vunpack.c.l.b16 %v635
        %v657 = vunpack.c.l.b16 %v636
        %v658 = vunpack.c.l.b16 %v637
        %v659 = vunpack.c.l.b16 %v638
        %v660 = vunpack.c.l.b16 %v639
        %v661 = vpack.c.b16 %v654, %v653
        %v662 = vpack.c.b16 %v656, %v655
        %v663 = vpack.c.b16 %v658, %v657
        %v664 = vpack.c.b16 %v660, %v659
        %v670 = vsel %vm343, %v630, 0
        %v673 = vsel %vm343, %v631, 0
        %675 = vmatprep.subr.bf16.mxu0 0
        %676 = vmatpush1.bf16.msra.mxu0 0
        %677 = vmatprep.subr.bf16.mxu0 0
        %678 = vmatpush1.bf16.msra.mxu0 0
        %679 = vmatprep.subr.bf16.mxu0 0
        %680 = vmatpush1.bf16.msra.mxu0 0
        %681 = vmatprep.subr.bf16.mxu0 0
        %682 = vmatpush1.bf16.msra.mxu0 0
        %683 = vmatprep.subr.bf16.mxu0 0
        %684 = vmatpush1.bf16.msra.mxu0 %v664
        %685 = vmatprep.subr.bf16.mxu0 0
        %686 = vmatpush1.bf16.msra.mxu0 %v663
        %687 = vmatprep.subr.bf16.mxu0 0
        %688 = vmatpush1.bf16.msra.mxu0 %v662
        %689 = vmatprep.subr.bf16.mxu0 0
        %690 = vmatpush1.bf16.msra.mxu0 %v661
        %691 = vmatprep.subr.bf16.mxu0 0
        %692 = vmatpush2.bf16.msra.mxu0 0
        %693 = vmatprep.subr.bf16.mxu0 0
        %694 = vmatpush2.bf16.msra.mxu0 0
        %695 = vmatprep.subr.bf16.mxu0 0
        %696 = vmatpush2.bf16.msra.mxu0 0
        %697 = vmatprep.subr.bf16.mxu0 0
        %698 = vmatpush2.bf16.msra.mxu0 0
        %699 = vmatprep.subr.bf16.mxu0 0
        %700 = vmatpush2.bf16.msra.mxu0 0
        %701 = vmatprep.subr.bf16.mxu0 0
        %702 = vmatpush2.bf16.msra.mxu0 0
        %703 = vmatprep.subr.bf16.mxu0 0
        %704 = vmatpush2.bf16.msra.mxu0 0
        %705 = vmatprep.subr.bf16.mxu0 0
        %706 = vmatpush2.bf16.msra.mxu0 0
        %707 = vmatprep.mubr.bf16.mxu0 0
        %708 = vmatmul.mubr.bf16.gmra.mxu0 %v670
        %v709 = vpop.f32.mrf.mxu0
        %v710 = vadd.f32 %v644, %v709
        %v711 = vpop.f32.mrf.mxu0
        %v712 = vpop.f32.mrf.mxu0
        %v713 = vadd.f32 %v644, %v712
        %v714 = vpop.f32.mrf.mxu0
        %715 = vmatprep.mubr.bf16.mxu0 0
        %716 = vmatmul.mubr.bf16.gmra.mxu0 %v673
        %v717 = vpop.f32.mrf.mxu0
        %v718 = vadd.f32 %v644, %v717
        %v719 = vpop.f32.mrf.mxu0
        %v720 = vpop.f32.mrf.mxu0
        %v721 = vadd.f32 %v644, %v720
        %v722 = vpop.f32.mrf.mxu0
        %723 = vdwg.mxu0
        %vm729 = vcmask 1043456
        %v730 = vrot.slane %v224, 4
        %v731 = vrot.slane %v225, 4
        %v732 = vsel %vm729, %v730, %v731
        %v733 = vrot.slane %v226, 4
        %v734 = vsel %vm729, %v731, %v733
        %v735 = vrot.slane %v227, 4
        %v736 = vsel %vm729, %v733, %v735
        %v737 = vrot.slane %v228, 4
        %v738 = vsel %vm729, %v735, %v737
        %v743 = vadd.f32 %v710, %v732
        %v744 = vadd.f32 %v713, %v734
        %v745 = vadd.f32 %v718, %v736
        %v746 = vadd.f32 %v721, %v738
        %v747 = vsel %vm338, %v743, 0.0
        %748 = vadd.xlane.f32.xlu0 %v747
        %v749 = vpop.xlane.xlu0 %748
        %v750 = vsel %vm338, %v744, 0.0
        %751 = vadd.xlane.f32.xlu0 %v750
        %v752 = vpop.xlane.xlu0 %751
        %v753 = vsel %vm338, %v745, 0.0
        %754 = vadd.xlane.f32.xlu0 %v753
        %v755 = vpop.xlane.xlu0 %754
        %v756 = vsel %vm338, %v746, 0.0
        %757 = vadd.xlane.f32.xlu0 %v756
        %v758 = vpop.xlane.xlu0 %757
        %v759 = vrcp.pop 32.0
        %v760 = vmul.f32 %v749, %v759
        %v761 = vmul.f32 %v752, %v759
        %v762 = vmul.f32 %v755, %v759
        %v763 = vmul.f32 %v758, %v759
        %v764 = vsub.f32 %v743, %v760
        %v765 = vsub.f32 %v744, %v761
        %v766 = vsub.f32 %v745, %v762
        %v767 = vsub.f32 %v746, %v763
        %v768 = vmul.f32 %v764, %v764
        %v769 = vmul.f32 %v765, %v765
        %v770 = vmul.f32 %v766, %v766
        %v771 = vmul.f32 %v767, %v767
        %v772 = vsel %vm338, %v768, 0.0
        %773 = vadd.xlane.f32.xlu0 %v772
        %v774 = vpop.xlane.xlu0 %773
        %v775 = vsel %vm338, %v769, 0.0
        %776 = vadd.xlane.f32.xlu0 %v775
        %v777 = vpop.xlane.xlu0 %776
        %v778 = vsel %vm338, %v770, 0.0
        %779 = vadd.xlane.f32.xlu0 %v778
        %v780 = vpop.xlane.xlu0 %779
        %v781 = vsel %vm338, %v771, 0.0
        %782 = vadd.xlane.f32.xlu0 %v781
        %v783 = vpop.xlane.xlu0 %782
        %v784 = vmul.f32 %v774, %v759
        %v785 = vmul.f32 %v777, %v759
        %v786 = vmul.f32 %v780, %v759
        %v787 = vmul.f32 %v783, %v759
        %v788 = vadd.f32 %v784, 1e-05
        %v789 = vadd.f32 %v785, 1e-05
        %v790 = vadd.f32 %v786, 1e-05
        %v791 = vadd.f32 %v787, 1e-05
        %v792 = vrsqrt.pop %v788
        %v793 = vrsqrt.pop %v789
        %v794 = vrsqrt.pop %v790
        %v795 = vrsqrt.pop %v791
        %v796 = vmul.f32 %v764, %v792
        %v797 = vmul.f32 %v765, %v793
        %v798 = vmul.f32 %v766, %v794
        %v799 = vmul.f32 %v767, %v795
        %v800 = vlaneseq
        %v801 = vshrl.u32 %v800, 7
        %v802 = vsub.s32 1, %v801
        %v803 = vrot.slane %v640, %v802
        %v804 = vmul.f32 %v796, %v803
        %v805 = vmul.f32 %v797, %v803
        %v806 = vmul.f32 %v798, %v803
        %v807 = vmul.f32 %v799, %v803
        %v808 = vlaneseq
        %v809 = vshrl.u32 %v808, 7
        %v810 = vsub.s32 2, %v809
        %v811 = vrot.slane %v640, %v810
        %v812 = vadd.f32 %v804, %v811
        %v813 = vadd.f32 %v805, %v811
        %v814 = vadd.f32 %v806, %v811
        %v815 = vadd.f32 %v807, %v811
        %816 = vst.msk [vmem:[%s217] sm:$0xff] %vm338, %v812
        %817 = vst.msk [vmem:[%s217 + $0x8] sm:$0xff] %vm338, %v813
        %818 = vst.msk [vmem:[%s217 + $0x10] sm:$0xff] %vm338, %v814
        %819 = vst.msk [vmem:[%s217 + $0x18] sm:$0xff] %vm338, %v815
        %s820 = sand.u32 %s137, 1
        %s821 = scalar_lea.sflag [#allocation3], %s820
        %s822 = sand.u32 %s137, 1
        %s823 = smul.addr %s822, 32
        %s824 = scalar_lea.vmem [#allocation2], %s823
        // Predicated region
        $region41: #{tpu_custom_call.1} parent=39 // pred_check
          %p825 = pneg %p147
        $region42: #{tpu_custom_call.1} parent=39 // pred_check_branch
          %827 = sbr.rel (%p825) target = $region44
        $region43: #{tpu_custom_call.1} parent=39 // pred_region
          %s829 = ssub.s32 512, 512
          %830 = vsyncadd %s821, %s829
          %s831 = smul.addr %s19, 4
          %s832 = smul.addr %s831, 128
          %s833 = scalar_lea.hbm %s5, %s832
          %s834 = sshll.u32 %s824, 4
          %s835 = int_to_ptr.vmem [resolvable:$true] %s834
          %840 = dma.vmem_to_hbm [thread:$0]  %s835, 512, %s833, %s821, 128, 128, 8
        $region44: #{tpu_custom_call.1} parent=39 // pred_fallthru
          _
      $region40: #{tpu_custom_call.1} parent=5 // pred_fallthru
        _
      %p841 = scmp.le.s32.totalorder 2, %s14
      // Predicated region
      $region45: #{tpu_custom_call.1} parent=5 // pred_check
        %p842 = pneg %p841
      $region46: #{tpu_custom_call.1} parent=5 // pred_check_branch
        %844 = sbr.rel (%p842) target = $region48
      $region47: #{tpu_custom_call.1} parent=5 // pred_region
        %s845 = ssub.s32 %s14, 2
        // Predicated region
        $region49: #{tpu_custom_call.1} parent=47 // pred_check
          %p846 = pneg %p153
        $region50: #{tpu_custom_call.1} parent=47 // pred_check_branch
          %848 = sbr.rel (%p846) target = $region52
        $region51: #{tpu_custom_call.1} parent=47 // pred_region
          %s849 = sand.u32 %s138, 1
          %s850 = scalar_lea.sflag [#allocation3], %s849
          %s851 = sand.u32 %s138, 1
          %s852 = smul.addr %s851, 32
          %s853 = scalar_lea.vmem [#allocation2], %s852
          %854 = dma.done %s850, 512
        $region52: #{tpu_custom_call.1} parent=47 // pred_fallthru
          _
      $region48: #{tpu_custom_call.1} parent=5 // pred_fallthru
        _
    $region6: #{tpu_custom_call.1} parent=1 // loop_footer
      %s18 = sadd.s32 1, %s14
    $region7: #{tpu_custom_call.1} parent=1 // loop_footer_branch
      %13 = sbr.rel target = $region3
    $region8: #{tpu_custom_call.1} parent=1 // loop_exit
      _
    %855 = vsyncpa [#allocation3], 1
    %s856 = scalar_lea.sflag [#allocation3], 1
    %857 = vsyncpa %s856, 1

// kernel: tpu_custom_call.1
$region0: #{tpu_custom_call.1}
  #allocation0 [shape = 'u32[]', space=smem, size = 0x4, offset = 0x4, fixed_abs, tag = 'smem constant byte address 0x4 - core index']
  #allocation1 [shape = 'u32[144,128]{1,0:T(1,128)}', space=vmem, size = 0x12000, scoped, tag = 'internal scratch']
  %s0 = inlined_call_operand.vmem [shape: f32[2,40,32], index: 0, kind: input, shape index: {}]
  %s1 = inlined_call_operand.vmem [shape: bf16[288,64], index: 1, kind: input, shape index: {}]
  %s2 = inlined_call_operand.vmem [shape: f32[1,64], index: 2, kind: input, shape index: {}]
  %s3 = inlined_call_operand.vmem [shape: bf16[64,32], index: 3, kind: input, shape index: {}]
  %s4 = inlined_call_operand.vmem [shape: f32[3,32], index: 4, kind: input, shape index: {}]
  %s5 = inlined_call_operand.hbm [shape: f32[2,32,32], index: 5, kind: output, shape index: {}]
  %s6 = sld [smem:[#allocation0]]
  $region53: #{tpu_custom_call.1} parent=0
    _
  %s8 = ssub.s32 1, %s6
  %s9 = scalar_select 0, %s8, %s6
  $region1: #{tpu_custom_call.1} parent=0
    #allocation2 [shape = 'u8[32768]{0}', space=vmem, size = 0x8000, scoped, tag = 'output window, operand 0']
    #allocation3 [shape = 's32[2]{0}', space=sflag, size = 0x8, scoped, tag = 'scoped memory for tpu_custom_call.1']
    %10 = vsyncpa [#allocation3], 0
    %s11 = scalar_lea.sflag [#allocation3], 1
    %12 = vsyncpa %s11, 0
    loop: start=0, step=1, limit=4
    $region2: #{tpu_custom_call.1} parent=1 // loop_pre_header
      _
    $region3: #{tpu_custom_call.1} parent=1 // loop_header
      %s14 = sphi 0, %s18
      %p15 = scmp.ge.s32.totalorder %s14, 4
      %s24 = sphi 0, %s26
      %s27 = sphi 0, %s24
      %s28 = sphi 0, %s27
      %s44 = sphi 0, %s28
      %s48 = sphi 0, %s48
      %s50 = sphi 0, %s48
      %s51 = sphi 0, %s50
      %s65 = sphi 0, %s51
      %s69 = sphi 0, %s69
      %s71 = sphi 0, %s69
      %s72 = sphi 0, %s71
      %s86 = sphi 0, %s72
      %s90 = sphi 0, %s90
      %s92 = sphi 0, %s90
      %s93 = sphi 0, %s92
      %s107 = sphi 0, %s93
      %s111 = sphi 0, %s111
      %s113 = sphi 0, %s111
      %s114 = sphi 0, %s113
      %s128 = sphi 0, %s114
      %s134 = sphi 0, %s136
      %s137 = sphi 0, %s134
      %s138 = sphi 0, %s137
      %s154 = sphi 0, %s138
    $region4: #{tpu_custom_call.1} parent=1 // loop_header_branch
      %17 = sbr.rel (%p15) target = $region8
    $region5: #{tpu_custom_call.1} parent=1 // loop_body
      %s19 = ssub.s32 %s14, 1
      %s20 = ssub.s32 %s14, 2
      %s21 = sadd.s32 %s14, 1
      %s22 = ssub.s32 %s14, %s21
      %p23 = scmp.eq.s32.totalorder %s22, 0
      %s25 = sadd.s32 %s24, 1
      %s26 = scalar_select %p23, %s24, %s25
      %p29 = pneg %p23
      %p30 = scmp.eq.s32.totalorder %s14, 1
      %p31 = por %p29, %p30
      %p32 = scmp.ne.s32.totalorder %s24, %s27
      %p33 = scmp.eq.s32.totalorder %s14, 0
      %p34 = por %p32, %p33
      %p35 = scmp.ne.s32.totalorder %s24, %s27
      %p36 = scmp.eq.s32.totalorder %s19, 1
      %p37 = por %p35, %p36
      %p38 = scmp.ne.s32.totalorder %s27, %s28
      %p39 = scmp.eq.s32.totalorder %s19, 0
      %p40 = por %p38, %p39
      %p41 = scmp.ne.s32.totalorder %s27, %s28
      %p42 = scmp.eq.s32.totalorder %s20, 1
      %p43 = por %p41, %p42
      %p45 = scmp.ne.s32.totalorder %s28, %s44
      %p46 = scmp.eq.s32.totalorder %s20, 0
      %p47 = por %p45, %p46
      %s49 = sadd.s32 %s48, 1
      %p52 = scmp.eq.s32.totalorder %s14, 1
      %p53 = scmp.ne.s32.totalorder %s48, %s50
      %p54 = scmp.eq.s32.totalorder %s14, 0
      %p55 = por %p53, %p54
      %p56 = scmp.ne.s32.totalorder %s48, %s50
      %p57 = scmp.eq.s32.totalorder %s19, 1
      %p58 = por %p56, %p57
      %p59 = scmp.ne.s32.totalorder %s50, %s51
      %p60 = scmp.eq.s32.totalorder %s19, 0
      %p61 = por %p59, %p60
      %p62 = scmp.ne.s32.totalorder %s50, %s51
      %p63 = scmp.eq.s32.totalorder %s20, 1
      %p64 = por %p62, %p63
      %p66 = scmp.ne.s32.totalorder %s51, %s65
      %p67 = scmp.eq.s32.totalorder %s20, 0
      %p68 = por %p66, %p67
      %s70 = sadd.s32 %s69, 1
      %p73 = scmp.eq.s32.totalorder %s14, 1
      %p74 = scmp.ne.s32.totalorder %s69, %s71
      %p75 = scmp.eq.s32.totalorder %s14, 0
      %p76 = por %p74, %p75
      %p77 = scmp.ne.s32.totalorder %s69, %s71
      %p78 = scmp.eq.s32.totalorder %s19, 1
      %p79 = por %p77, %p78
      %p80 = scmp.ne.s32.totalorder %s71, %s72
      %p81 = scmp.eq.s32.totalorder %s19, 0
      %p82 = por %p80, %p81
      %p83 = scmp.ne.s32.totalorder %s71, %s72
      %p84 = scmp.eq.s32.totalorder %s20, 1
      %p85 = por %p83, %p84
      %p87 = scmp.ne.s32.totalorder %s72, %s86
      %p88 = scmp.eq.s32.totalorder %s20, 0
      %p89 = por %p87, %p88
      %s91 = sadd.s32 %s90, 1
      %p94 = scmp.eq.s32.totalorder %s14, 1
      %p95 = scmp.ne.s32.totalorder %s90, %s92
      %p96 = scmp.eq.s32.totalorder %s14, 0
      %p97 = por %p95, %p96
      %p98 = scmp.ne.s32.totalorder %s90, %s92
      %p99 = scmp.eq.s32.totalorder %s19, 1
      %p100 = por %p98, %p99
      %p101 = scmp.ne.s32.totalorder %s92, %s93
      %p102 = scmp.eq.s32.totalorder %s19, 0
      %p103 = por %p101, %p102
      %p104 = scmp.ne.s32.totalorder %s92, %s93
      %p105 = scmp.eq.s32.totalorder %s20, 1
      %p106 = por %p104, %p105
      %p108 = scmp.ne.s32.totalorder %s93, %s107
      %p109 = scmp.eq.s32.totalorder %s20, 0
      %p110 = por %p108, %p109
      %s112 = sadd.s32 %s111, 1
      %p115 = scmp.eq.s32.totalorder %s14, 1
      %p116 = scmp.ne.s32.totalorder %s111, %s113
      %p117 = scmp.eq.s32.totalorder %s14, 0
      %p118 = por %p116, %p117
      %p119 = scmp.ne.s32.totalorder %s111, %s113
      %p120 = scmp.eq.s32.totalorder %s19, 1
      %p121 = por %p119, %p120
      %p122 = scmp.ne.s32.totalorder %s113, %s114
      %p123 = scmp.eq.s32.totalorder %s19, 0
      %p124 = por %p122, %p123
      %p125 = scmp.ne.s32.totalorder %s113, %s114
      %p126 = scmp.eq.s32.totalorder %s20, 1
      %p127 = por %p125, %p126
      %p129 = scmp.ne.s32.totalorder %s114, %s128
      %p130 = scmp.eq.s32.totalorder %s20, 0
      %p131 = por %p129, %p130
      %s132 = ssub.s32 %s14, %s21
      %p133 = scmp.eq.s32.totalorder %s132, 0
      %s135 = sadd.s32 %s134, 1
      %s136 = scalar_select %p133, %s134, %s135
      %p139 = pneg %p133
      %p140 = scmp.eq.s32.totalorder %s14, 1
      %p141 = por %p139, %p140
      %p142 = scmp.ne.s32.totalorder %s134, %s137
      %p143 = scmp.eq.s32.totalorder %s14, 0
      %p144 = por %p142, %p143
      %p145 = scmp.ne.s32.totalorder %s134, %s137
      %p146 = scmp.eq.s32.totalorder %s19, 1
      %p147 = por %p145, %p146
      %p148 = scmp.ne.s32.totalorder %s137, %s138
      %p149 = scmp.eq.s32.totalorder %s19, 0
      %p150 = por %p148, %p149
      %p151 = scmp.ne.s32.totalorder %s137, %s138
      %p152 = scmp.eq.s32.totalorder %s20, 1
      %p153 = por %p151, %p152
      %p155 = scmp.ne.s32.totalorder %s138, %s154
      %p156 = scmp.eq.s32.totalorder %s20, 0
      %p157 = por %p155, %p156
      %p158 = scmp.le.s32.totalorder 1, %s14
      %p159 = scmp.lt.s32.totalorder %s14, 3
      %p160 = pnand %p158, %p159
      %p161 = pneg %p160
      // Predicated region
      $region9: #{tpu_custom_call.1} parent=5 // pred_check
        _
      $region10: #{tpu_custom_call.1} parent=5 // pred_check_branch
        %163 = sbr.rel (%p160) target = $region12
      $region11: #{tpu_custom_call.1} parent=5 // pred_region
        %s164 = ssub.s32 %s14, 1
        // Predicated region
        $region13: #{tpu_custom_call.1} parent=11 // pred_check
          %p165 = pneg %p61
        $region14: #{tpu_custom_call.1} parent=11 // pred_check_branch
          %167 = sbr.rel (%p165) target = $region16
        $region15: #{tpu_custom_call.1} parent=11 // pred_region
          _
        $region16: #{tpu_custom_call.1} parent=11 // pred_fallthru
          _
        // Predicated region
        $region17: #{tpu_custom_call.1} parent=11 // pred_check
          %p168 = pneg %p82
        $region18: #{tpu_custom_call.1} parent=11 // pred_check_branch
          %170 = sbr.rel (%p168) target = $region20
        $region19: #{tpu_custom_call.1} parent=11 // pred_region
          _
        $region20: #{tpu_custom_call.1} parent=11 // pred_fallthru
          _
        // Predicated region
        $region21: #{tpu_custom_call.1} parent=11 // pred_check
          %p171 = pneg %p103
        $region22: #{tpu_custom_call.1} parent=11 // pred_check_branch
          %173 = sbr.rel (%p171) target = $region24
        $region23: #{tpu_custom_call.1} parent=11 // pred_region
          _
        $region24: #{tpu_custom_call.1} parent=11 // pred_fallthru
          _
        // Predicated region
        $region25: #{tpu_custom_call.1} parent=11 // pred_check
          %p174 = pneg %p124
        $region26: #{tpu_custom_call.1} parent=11 // pred_check_branch
          %176 = sbr.rel (%p174) target = $region28
        $region27: #{tpu_custom_call.1} parent=11 // pred_region
          _
        $region28: #{tpu_custom_call.1} parent=11 // pred_fallthru
          _
      $region12: #{tpu_custom_call.1} parent=5 // pred_fallthru
        _
      %p177 = scmp.lt.s32.totalorder %s14, 2
      // Predicated region
      $region29: #{tpu_custom_call.1} parent=5 // pred_check
        %p178 = pneg %p177
      $region30: #{tpu_custom_call.1} parent=5 // pred_check_branch
        %180 = sbr.rel (%p178) target = $region32
      $region31: #{tpu_custom_call.1} parent=5 // pred_region
        // Predicated region
        $region33: #{tpu_custom_call.1} parent=31 // pred_check
          %p181 = pneg %p34
        $region34: #{tpu_custom_call.1} parent=31 // pred_check_branch
          %183 = sbr.rel (%p181) target = $region36
        $region35: #{tpu_custom_call.1} parent=31 // pred_region
          %p184 = scmp.lt.s32.totalorder %s14, 1
          %s185 = scalar_select %p184, %s14, 1
          %s186 = smul.addr %s185, 5
          %s187 = smul.addr %s186, 8
          %s188 = scalar_lea.vmem %s0, %s187
        $region36: #{tpu_custom_call.1} parent=31 // pred_fallthru
          _
      $region32: #{tpu_custom_call.1} parent=5 // pred_fallthru
        _
      %p189 = scmp.le.s32.totalorder 1, %s14
      %p190 = scmp.lt.s32.totalorder %s14, 3
      %p191 = pnand %p189, %p190
      %p192 = pneg %p191
      // Predicated region
      $region37: #{tpu_custom_call.1} parent=5 // pred_check
        _
      $region38: #{tpu_custom_call.1} parent=5 // pred_check_branch
        %194 = sbr.rel (%p191) target = $region40
      $region39: #{tpu_custom_call.1} parent=5 // pred_region
        %s195 = ssub.s32 %s14, 1
        %p196 = scmp.lt.s32.totalorder %s19, 1
        %s197 = scalar_select %p196, %s19, 1
        %s198 = smul.addr %s197, 5
        %s199 = smul.addr %s198, 8
        %s200 = scalar_lea.vmem %s0, %s199
        %p201 = pneg %p40
        %p202 = pneg %p37
        %p203 = pneg %p61
        %p204 = pneg %p58
        %p205 = pneg %p82
        %p206 = pneg %p79
        %p207 = pneg %p103
        %p208 = pneg %p100
        %p209 = pneg %p124
        %p210 = pneg %p121
        %p211 = pneg %p150
        %p212 = pneg %p147
        %s213 = sand.u32 %s137, 1
        %s214 = scalar_lea.sflag [#allocation3], %s213
        %s215 = sand.u32 %s137, 1
        %s216 = smul.addr %s215, 32
        %s217 = scalar_lea.vmem [#allocation2], %s216
        %p218 = scmp.lt.s32.totalorder %s19, 1
        %s219 = scalar_select %p218, %s19, 1
        %s220 = smul.addr %s219, 5
        %s221 = smul.addr %s220, 8
        %s222 = scalar_lea.vmem %s0, %s221
        %v224 = vld [vmem:[%s222] sm:$0xff]
        %v225 = vld [vmem:[%s222 + $0x8] sm:$0xff]
        %v226 = vld [vmem:[%s222 + $0x10] sm:$0xff]
        %v227 = vld [vmem:[%s222 + $0x18] sm:$0xff]
        %v228 = vld [vmem:[%s222 + $0x20] sm:$0xff]
        %v229 = vpack.c.bf16 %v225, %v224
        %v230 = vpack.c.bf16 %v227, %v226
        %v231 = vpack.c.bf16 %v228, %v228
        %v232 = vpack.c.bf16 %v226, %v225
        %v233 = vpack.c.bf16 %v228, %v227
        %vm234 = vsmask.f32 7424
        %v236 = vshrl.u32 %v229, 16
        %v238 = vshll.u32 %v229, 16
        %v240 = vrot.slane %v238, 1
        %v241 = vor.u32 %v236, %v240
        %v243 = vshll.u32 %v230, 16
        %v245 = vrot.slane %v243, 1
        %v246 = vsel %vm234, %v241, %v245
        %v247 = vshrl.u32 %v230, 16
        %v249 = vor.u32 %v247, %v245
        %v251 = vshll.u32 %v231, 16
        %v253 = vrot.slane %v251, 1
        %v254 = vsel %vm234, %v249, %v253
        %255 = vrot.lane.b32.xlu0 %v246, 32
        %v256 = vpop.permute.xlu0 %255
        %257 = vrot.lane.b32.xlu0 %v254, 32
        %v258 = vpop.permute.xlu0 %257
        %vm262 = vcmask 1046528
        %v263 = vrot.slane %v229, 1
        %v264 = vrot.slane %v230, 1
        %v265 = vsel %vm262, %v263, %v264
        %v266 = vrot.slane %v231, 1
        %v267 = vsel %vm262, %v264, %v266
        %268 = vrot.lane.b32.xlu0 %v265, 64
        %v269 = vpop.permute.xlu0 %268
        %270 = vrot.lane.b32.xlu0 %v267, 64
        %v271 = vpop.permute.xlu0 %270
        %vm272 = vsmask.f32 6400
        %v273 = vrot.slane %v236, 1
        %v274 = vrot.slane %v238, 2
        %v275 = vor.u32 %v273, %v274
        %v276 = vrot.slane %v247, 1
        %v277 = vrot.slane %v243, 2
        %v278 = vor.u32 %v276, %v277
        %v279 = vsel %vm272, %v275, %v278
        %v280 = vshrl.u32 %v231, 16
        %v282 = vrot.slane %v280, 1
        %v283 = vrot.slane %v251, 2
        %v284 = vor.u32 %v282, %v283
        %v285 = vsel %vm272, %v278, %v284
        %286 = vrot.lane.b32.xlu0 %v279, 96
        %v287 = vpop.permute.xlu0 %286
        %288 = vrot.lane.b32.xlu0 %v285, 96
        %v289 = vpop.permute.xlu0 %288
        %vm290 = vcmask 1045504
        %v291 = vrot.slane %v229, 2
        %v292 = vrot.slane %v230, 2
        %v293 = vsel %vm290, %v291, %v292
        %v294 = vrot.slane %v231, 2
        %v295 = vsel %vm290, %v292, %v294
        %vm296 = vsmask.f32 5376
        %v297 = vrot.slane %v236, 2
        %v298 = vrot.slane %v238, 3
        %v299 = vor.u32 %v297, %v298
        %v300 = vrot.slane %v247, 2
        %v301 = vrot.slane %v243, 3
        %v302 = vor.u32 %v300, %v301
        %v303 = vsel %vm296, %v299, %v302
        %v304 = vrot.slane %v280, 2
        %v305 = vrot.slane %v251, 3
        %v306 = vor.u32 %v304, %v305
        %v307 = vsel %vm296, %v302, %v306
        %308 = vrot.lane.b32.xlu0 %v303, 32
        %v309 = vpop.permute.xlu0 %308
        %310 = vrot.lane.b32.xlu0 %v307, 32
        %v311 = vpop.permute.xlu0 %310
        %vm312 = vcmask 1044480
        %v313 = vrot.slane %v229, 3
        %v314 = vrot.slane %v230, 3
        %v315 = vsel %vm312, %v313, %v314
        %v316 = vrot.slane %v231, 3
        %v317 = vsel %vm312, %v314, %v316
        %318 = vrot.lane.b32.xlu0 %v315, 64
        %v319 = vpop.permute.xlu0 %318
        %320 = vrot.lane.b32.xlu0 %v317, 64
        %v321 = vpop.permute.xlu0 %320
        %vm322 = vsmask.f32 4352
        %v323 = vrot.slane %v236, 3
        %v324 = vrot.slane %v238, 4
        %v325 = vor.u32 %v323, %v324
        %v326 = vrot.slane %v247, 3
        %v327 = vrot.slane %v243, 4
        %v328 = vor.u32 %v326, %v327
        %v329 = vsel %vm322, %v325, %v328
        %v330 = vrot.slane %v280, 3
        %v331 = vrot.slane %v251, 4
        %v332 = vor.u32 %v330, %v331
        %v333 = vsel %vm322, %v328, %v332
        %334 = vrot.lane.b32.xlu0 %v329, 96
        %v335 = vpop.permute.xlu0 %334
        %336 = vrot.lane.b32.xlu0 %v333, 96
        %v337 = vpop.permute.xlu0 %336
        %vm338 = vcmask 261120
        %v340 = vsel %vm338, %v229, %v256
        %v342 = vsel %vm338, %v230, %v258
        %vm343 = vcmask 523264
        %v345 = vsel %vm343, %v340, %v269
        %v347 = vsel %vm343, %v342, %v271
        %vm348 = vcmask 785408
        %v350 = vsel %vm348, %v345, %v287
        %v353 = vsel %vm348, %v347, %v289
        %v357 = vsel %vm338, %v293, %v309
        %v360 = vsel %vm338, %v295, %v311
        %v362 = vsel %vm343, %v357, %v319
        %v364 = vsel %vm343, %v360, %v321
        %v366 = vsel %vm348, %v362, %v335
        %v369 = vsel %vm348, %v364, %v337
        %v371 = vld [vmem:[%s1] sm:$0xf]
        %v372 = vld [vmem:[%s1 + $0x4] sm:$0xf]
        %v373 = vld [vmem:[%s1 + $0x8] sm:$0xf]
        %v374 = vld [vmem:[%s1 + $0xc] sm:$0xf]
        %v375 = vld [vmem:[%s1 + $0x10] sm:$0xf]
        %v376 = vld [vmem:[%s1 + $0x14] sm:$0xf]
        %v377 = vld [vmem:[%s1 + $0x18] sm:$0xf]
        %v378 = vld [vmem:[%s1 + $0x1c] sm:$0xf]
        %v379 = vld [vmem:[%s1 + $0x20] sm:$0xf]
        %v380 = vld [vmem:[%s1 + $0x24] sm:$0xf]
        %v381 = vld [vmem:[%s1 + $0x28] sm:$0xf]
        %v382 = vld [vmem:[%s1 + $0x2c] sm:$0xf]
        %v383 = vld [vmem:[%s1 + $0x30] sm:$0xf]
        %v384 = vld [vmem:[%s1 + $0x34] sm:$0xf]
        %v385 = vld [vmem:[%s1 + $0x38] sm:$0xf]
        %v386 = vld [vmem:[%s1 + $0x3c] sm:$0xf]
        %v387 = vld [vmem:[%s1 + $0x40] sm:$0xf]
        %v388 = vld [vmem:[%s1 + $0x44] sm:$0xf]
        %v389 = vld [vmem:[%s1 + $0x48] sm:$0xf]
        %v390 = vld [vmem:[%s1 + $0x4c] sm:$0xf]
        %v391 = vld [vmem:[%s1 + $0x50] sm:$0xf]
        %v392 = vld [vmem:[%s1 + $0x54] sm:$0xf]
        %v393 = vld [vmem:[%s1 + $0x58] sm:$0xf]
        %v394 = vld [vmem:[%s1 + $0x5c] sm:$0xf]
        %v395 = vld [vmem:[%s1 + $0x60] sm:$0xf]
        %v396 = vld [vmem:[%s1 + $0x64] sm:$0xf]
        %v397 = vld [vmem:[%s1 + $0x68] sm:$0xf]
        %v398 = vld [vmem:[%s1 + $0x6c] sm:$0xf]
        %v399 = vld [vmem:[%s1 + $0x70] sm:$0xf]
        %v400 = vld [vmem:[%s1 + $0x74] sm:$0xf]
        %v401 = vld [vmem:[%s1 + $0x78] sm:$0xf]
        %v402 = vld [vmem:[%s1 + $0x7c] sm:$0xf]
        %v403 = vld [vmem:[%s1 + $0x80] sm:$0xf]
        %v404 = vld [vmem:[%s1 + $0x84] sm:$0xf]
        %v405 = vld [vmem:[%s1 + $0x88] sm:$0xf]
        %v406 = vld [vmem:[%s1 + $0x8c] sm:$0xf]
        %v407 = vld [vmem:[%s2] sm:$0x1]
        %v409 = vlaneseq
        %v410 = vshrl.u32 %v409, 7
        %v411 = vsub.s32 0, %v410
        %v412 = vrot.slane %v407, %v411
        %v450 = vunpack.c.l.b16 %v371
        %v451 = vunpack.c.l.b16 %v372
        %v452 = vunpack.c.l.b16 %v373
        %v453 = vunpack.c.l.b16 %v374
        %v454 = vunpack.c.l.b16 %v375
        %v455 = vunpack.c.l.b16 %v376
        %v456 = vunpack.c.l.b16 %v377
        %v457 = vunpack.c.l.b16 %v378
        %v458 = vunpack.c.l.b16 %v379
        %v459 = vunpack.c.l.b16 %v380
        %v460 = vunpack.c.l.b16 %v381
        %v461 = vunpack.c.l.b16 %v382
        %v462 = vunpack.c.l.b16 %v383
        %v463 = vunpack.c.l.b16 %v384
        %v464 = vunpack.c.l.b16 %v385
        %v465 = vunpack.c.l.b16 %v386
        %v466 = vunpack.c.l.b16 %v387
        %v467 = vunpack.c.l.b16 %v388
        %v468 = vunpack.c.l.b16 %v389
        %v469 = vunpack.c.l.b16 %v390
        %v470 = vunpack.c.l.b16 %v391
        %v471 = vunpack.c.l.b16 %v392
        %v472 = vunpack.c.l.b16 %v393
        %v473 = vunpack.c.l.b16 %v394
        %v474 = vunpack.c.l.b16 %v395
        %v475 = vunpack.c.l.b16 %v396
        %v476 = vunpack.c.l.b16 %v397
        %v477 = vunpack.c.l.b16 %v398
        %v478 = vunpack.c.l.b16 %v399
        %v479 = vunpack.c.l.b16 %v400
        %v480 = vunpack.c.l.b16 %v401
        %v481 = vunpack.c.l.b16 %v402
        %v482 = vunpack.c.l.b16 %v403
        %v483 = vunpack.c.l.b16 %v404
        %v484 = vunpack.c.l.b16 %v405
        %v485 = vunpack.c.l.b16 %v406
        %v486 = vpack.c.b16 %v451, %v450
        %v487 = vpack.c.b16 %v453, %v452
        %v488 = vpack.c.b16 %v455, %v454
        %v489 = vpack.c.b16 %v457, %v456
        %v490 = vpack.c.b16 %v459, %v458
        %v491 = vpack.c.b16 %v461, %v460
        %v492 = vpack.c.b16 %v463, %v462
        %v493 = vpack.c.b16 %v465, %v464
        %v494 = vpack.c.b16 %v467, %v466
        %v495 = vpack.c.b16 %v469, %v468
        %v496 = vpack.c.b16 %v471, %v470
        %v497 = vpack.c.b16 %v473, %v472
        %v498 = vpack.c.b16 %v475, %v474
        %v499 = vpack.c.b16 %v477, %v476
        %v500 = vpack.c.b16 %v479, %v478
        %v501 = vpack.c.b16 %v481, %v480
        %v502 = vpack.c.b16 %v483, %v482
        %v503 = vpack.c.b16 %v485, %v484
        %v523 = vsel %vm338, %v232, 0
        %v526 = vsel %vm338, %v233, 0
        %528 = vmatprep.subr.bf16.mxu0 0
        %529 = vmatpush1.bf16.msra.mxu0 %v493
        %530 = vmatprep.subr.bf16.mxu0 0
        %531 = vmatpush1.bf16.msra.mxu0 %v492
        %532 = vmatprep.subr.bf16.mxu0 0
        %533 = vmatpush1.bf16.msra.mxu0 %v491
        %534 = vmatprep.subr.bf16.mxu0 0
        %535 = vmatpush1.bf16.msra.mxu0 %v490
        %536 = vmatprep.subr.bf16.mxu0 0
        %537 = vmatpush1.bf16.msra.mxu0 %v489
        %538 = vmatprep.subr.bf16.mxu0 0
        %539 = vmatpush1.bf16.msra.mxu0 %v488
        %540 = vmatprep.subr.bf16.mxu0 0
        %541 = vmatpush1.bf16.msra.mxu0 %v487
        %542 = vmatprep.subr.bf16.mxu0 0
        %543 = vmatpush1.bf16.msra.mxu0 %v486
        %544 = vmatprep.subr.bf16.mxu0 0
        %545 = vmatpush2.bf16.msra.mxu0 %v501
        %546 = vmatprep.subr.bf16.mxu0 0
        %547 = vmatpush2.bf16.msra.mxu0 %v500
        %548 = vmatprep.subr.bf16.mxu0 0
        %549 = vmatpush2.bf16.msra.mxu0 %v499
        %550 = vmatprep.subr.bf16.mxu0 0
        %551 = vmatpush2.bf16.msra.mxu0 %v498
        %552 = vmatprep.subr.bf16.mxu0 0
        %553 = vmatpush2.bf16.msra.mxu0 %v497
        %554 = vmatprep.subr.bf16.mxu0 0
        %555 = vmatpush2.bf16.msra.mxu0 %v496
        %556 = vmatprep.subr.bf16.mxu0 0
        %557 = vmatpush2.bf16.msra.mxu0 %v495
        %558 = vmatprep.subr.bf16.mxu0 0
        %559 = vmatpush2.bf16.msra.mxu0 %v494
        %560 = vmatprep.mubr.bf16.mxu0 %v366
        %561 = vmatmul.mubr.bf16.gmra.mxu0 %v350
        %v562 = vpop.f32.mrf.mxu0
        %v563 = vadd.f32 %v412, %v562
        %v564 = vpop.f32.mrf.mxu0
        %v565 = vpop.f32.mrf.mxu0
        %v566 = vadd.f32 %v412, %v565
        %v567 = vpop.f32.mrf.mxu0
        %568 = vmatprep.mubr.bf16.mxu0 %v369
        %569 = vmatmul.mubr.bf16.gmra.mxu0 %v353
        %v570 = vpop.f32.mrf.mxu0
        %v571 = vadd.f32 %v412, %v570
        %v572 = vpop.f32.mrf.mxu0
        %v573 = vpop.f32.mrf.mxu0
        %v574 = vadd.f32 %v412, %v573
        %v575 = vpop.f32.mrf.mxu0
        %576 = vdwg.mxu0
        %577 = vmatprep.subr.bf16.mxu0 0
        %578 = vmatpush1.bf16.msra.mxu0 0
        %579 = vmatprep.subr.bf16.mxu0 0
        %580 = vmatpush1.bf16.msra.mxu0 0
        %581 = vmatprep.subr.bf16.mxu0 0
        %582 = vmatpush1.bf16.msra.mxu0 0
        %583 = vmatprep.subr.bf16.mxu0 0
        %584 = vmatpush1.bf16.msra.mxu0 0
        %585 = vmatprep.subr.bf16.mxu0 0
        %586 = vmatpush1.bf16.msra.mxu0 0
        %587 = vmatprep.subr.bf16.mxu0 0
        %588 = vmatpush1.bf16.msra.mxu0 0
        %589 = vmatprep.subr.bf16.mxu0 0
        %590 = vmatpush1.bf16.msra.mxu0 %v503
        %591 = vmatprep.subr.bf16.mxu0 0
        %592 = vmatpush1.bf16.msra.mxu0 %v502
        %593 = vmatprep.subr.bf16.mxu0 0
        %594 = vmatpush2.bf16.msra.mxu0 0
        %595 = vmatprep.subr.bf16.mxu0 0
        %596 = vmatpush2.bf16.msra.mxu0 0
        %597 = vmatprep.subr.bf16.mxu0 0
        %598 = vmatpush2.bf16.msra.mxu0 0
        %599 = vmatprep.subr.bf16.mxu0 0
        %600 = vmatpush2.bf16.msra.mxu0 0
        %601 = vmatprep.subr.bf16.mxu0 0
        %602 = vmatpush2.bf16.msra.mxu0 0
        %603 = vmatprep.subr.bf16.mxu0 0
        %604 = vmatpush2.bf16.msra.mxu0 0
        %605 = vmatprep.subr.bf16.mxu0 0
        %606 = vmatpush2.bf16.msra.mxu0 0
        %607 = vmatprep.subr.bf16.mxu0 0
        %608 = vmatpush2.bf16.msra.mxu0 0
        %609 = vmatprep.mubr.bf16.mxu0 0
        %610 = vmatmul.mubr.bf16.gmra.mxu0 %v523
        %v611 = vpop.f32.mrf.mxu0
        %v612 = vadd.f32 %v563, %v611
        %v613 = vpop.f32.mrf.mxu0
        %v614 = vpop.f32.mrf.mxu0
        %v615 = vadd.f32 %v566, %v614
        %v616 = vpop.f32.mrf.mxu0
        %617 = vmatprep.mubr.bf16.mxu0 0
        %618 = vmatmul.mubr.bf16.gmra.mxu0 %v526
        %v619 = vpop.f32.mrf.mxu0
        %v620 = vadd.f32 %v571, %v619
        %v621 = vpop.f32.mrf.mxu0
        %v622 = vpop.f32.mrf.mxu0
        %v623 = vadd.f32 %v574, %v622
        %v624 = vpop.f32.mrf.mxu0
        %625 = vdwg.mxu0
        %v626 = vmax.f32 %v612, 0.0
        %v627 = vmax.f32 %v615, 0.0
        %v628 = vmax.f32 %v620, 0.0
        %v629 = vmax.f32 %v623, 0.0
        %v630 = vpack.c.bf16 %v627, %v626
        %v631 = vpack.c.bf16 %v629, %v628
        %v632 = vld [vmem:[%s3] sm:$0xf]
        %v633 = vld [vmem:[%s3 + $0x4] sm:$0xf]
        %v634 = vld [vmem:[%s3 + $0x8] sm:$0xf]
        %v635 = vld [vmem:[%s3 + $0xc] sm:$0xf]
        %v636 = vld [vmem:[%s3 + $0x10] sm:$0xf]
        %v637 = vld [vmem:[%s3 + $0x14] sm:$0xf]
        %v638 = vld [vmem:[%s3 + $0x18] sm:$0xf]
        %v639 = vld [vmem:[%s3 + $0x1c] sm:$0xf]
        %v640 = vld [vmem:[%s4] sm:$0x7]
        %v641 = vlaneseq
        %v642 = vshrl.u32 %v641, 7
        %v643 = vsub.s32 0, %v642
        %v644 = vrot.slane %v640, %v643
        %v653 = vunpack.c.l.b16 %v632
        %v654 = vunpack.c.l.b16 %v633
        %v655 = vunpack.c.l.b16 %v634
        %v656 = vunpack.c.l.b16 %v635
        %v657 = vunpack.c.l.b16 %v636
        %v658 = vunpack.c.l.b16 %v637
        %v659 = vunpack.c.l.b16 %v638
        %v660 = vunpack.c.l.b16 %v639
        %v661 = vpack.c.b16 %v654, %v653
        %v662 = vpack.c.b16 %v656, %v655
        %v663 = vpack.c.b16 %v658, %v657
        %v664 = vpack.c.b16 %v660, %v659
        %v670 = vsel %vm343, %v630, 0
        %v673 = vsel %vm343, %v631, 0
        %675 = vmatprep.subr.bf16.mxu0 0
        %676 = vmatpush1.bf16.msra.mxu0 0
        %677 = vmatprep.subr.bf16.mxu0 0
        %678 = vmatpush1.bf16.msra.mxu0 0
        %679 = vmatprep.subr.bf16.mxu0 0
        %680 = vmatpush1.bf16.msra.mxu0 0
        %681 = vmatprep.subr.bf16.mxu0 0
        %682 = vmatpush1.bf16.msra.mxu0 0
        %683 = vmatprep.subr.bf16.mxu0 0
        %684 = vmatpush1.bf16.msra.mxu0 %v664
        %685 = vmatprep.subr.bf16.mxu0 0
        %686 = vmatpush1.bf16.msra.mxu0 %v663
        %687 = vmatprep.subr.bf16.mxu0 0
        %688 = vmatpush1.bf16.msra.mxu0 %v662
        %689 = vmatprep.subr.bf16.mxu0 0
        %690 = vmatpush1.bf16.msra.mxu0 %v661
        %691 = vmatprep.subr.bf16.mxu0 0
        %692 = vmatpush2.bf16.msra.mxu0 0
        %693 = vmatprep.subr.bf16.mxu0 0
        %694 = vmatpush2.bf16.msra.mxu0 0
        %695 = vmatprep.subr.bf16.mxu0 0
        %696 = vmatpush2.bf16.msra.mxu0 0
        %697 = vmatprep.subr.bf16.mxu0 0
        %698 = vmatpush2.bf16.msra.mxu0 0
        %699 = vmatprep.subr.bf16.mxu0 0
        %700 = vmatpush2.bf16.msra.mxu0 0
        %701 = vmatprep.subr.bf16.mxu0 0
        %702 = vmatpush2.bf16.msra.mxu0 0
        %703 = vmatprep.subr.bf16.mxu0 0
        %704 = vmatpush2.bf16.msra.mxu0 0
        %705 = vmatprep.subr.bf16.mxu0 0
        %706 = vmatpush2.bf16.msra.mxu0 0
        %707 = vmatprep.mubr.bf16.mxu0 0
        %708 = vmatmul.mubr.bf16.gmra.mxu0 %v670
        %v709 = vpop.f32.mrf.mxu0
        %v710 = vadd.f32 %v644, %v709
        %v711 = vpop.f32.mrf.mxu0
        %v712 = vpop.f32.mrf.mxu0
        %v713 = vadd.f32 %v644, %v712
        %v714 = vpop.f32.mrf.mxu0
        %715 = vmatprep.mubr.bf16.mxu0 0
        %716 = vmatmul.mubr.bf16.gmra.mxu0 %v673
        %v717 = vpop.f32.mrf.mxu0
        %v718 = vadd.f32 %v644, %v717
        %v719 = vpop.f32.mrf.mxu0
        %v720 = vpop.f32.mrf.mxu0
        %v721 = vadd.f32 %v644, %v720
        %v722 = vpop.f32.mrf.mxu0
        %723 = vdwg.mxu0
        %vm729 = vcmask 1043456
        %v730 = vrot.slane %v224, 4
        %v731 = vrot.slane %v225, 4
        %v732 = vsel %vm729, %v730, %v731
        %v733 = vrot.slane %v226, 4
        %v734 = vsel %vm729, %v731, %v733
        %v735 = vrot.slane %v227, 4
        %v736 = vsel %vm729, %v733, %v735
        %v737 = vrot.slane %v228, 4
        %v738 = vsel %vm729, %v735, %v737
        %v743 = vadd.f32 %v710, %v732
        %v744 = vadd.f32 %v713, %v734
        %v745 = vadd.f32 %v718, %v736
        %v746 = vadd.f32 %v721, %v738
        %v747 = vsel %vm338, %v743, 0.0
        %748 = vadd.xlane.f32.xlu0 %v747
        %v749 = vpop.xlane.xlu0 %748
        %v750 = vsel %vm338, %v744, 0.0
        %751 = vadd.xlane.f32.xlu0 %v750
        %v752 = vpop.xlane.xlu0 %751
        %v753 = vsel %vm338, %v745, 0.0
        %754 = vadd.xlane.f32.xlu0 %v753
        %v755 = vpop.xlane.xlu0 %754
        %v756 = vsel %vm338, %v746, 0.0
        %757 = vadd.xlane.f32.xlu0 %v756
        %v758 = vpop.xlane.xlu0 %757
        %v759 = vrcp.pop 32.0
        %v760 = vmul.f32 %v749, %v759
        %v761 = vmul.f32 %v752, %v759
        %v762 = vmul.f32 %v755, %v759
        %v763 = vmul.f32 %v758, %v759
        %v764 = vsub.f32 %v743, %v760
        %v765 = vsub.f32 %v744, %v761
        %v766 = vsub.f32 %v745, %v762
        %v767 = vsub.f32 %v746, %v763
        %v768 = vmul.f32 %v764, %v764
        %v769 = vmul.f32 %v765, %v765
        %v770 = vmul.f32 %v766, %v766
        %v771 = vmul.f32 %v767, %v767
        %v772 = vsel %vm338, %v768, 0.0
        %773 = vadd.xlane.f32.xlu0 %v772
        %v774 = vpop.xlane.xlu0 %773
        %v775 = vsel %vm338, %v769, 0.0
        %776 = vadd.xlane.f32.xlu0 %v775
        %v777 = vpop.xlane.xlu0 %776
        %v778 = vsel %vm338, %v770, 0.0
        %779 = vadd.xlane.f32.xlu0 %v778
        %v780 = vpop.xlane.xlu0 %779
        %v781 = vsel %vm338, %v771, 0.0
        %782 = vadd.xlane.f32.xlu0 %v781
        %v783 = vpop.xlane.xlu0 %782
        %v784 = vmul.f32 %v774, %v759
        %v785 = vmul.f32 %v777, %v759
        %v786 = vmul.f32 %v780, %v759
        %v787 = vmul.f32 %v783, %v759
        %v788 = vadd.f32 %v784, 1e-05
        %v789 = vadd.f32 %v785, 1e-05
        %v790 = vadd.f32 %v786, 1e-05
        %v791 = vadd.f32 %v787, 1e-05
        %v792 = vrsqrt.pop %v788
        %v793 = vrsqrt.pop %v789
        %v794 = vrsqrt.pop %v790
        %v795 = vrsqrt.pop %v791
        %v796 = vmul.f32 %v764, %v792
        %v797 = vmul.f32 %v765, %v793
        %v798 = vmul.f32 %v766, %v794
        %v799 = vmul.f32 %v767, %v795
        %v800 = vlaneseq
        %v801 = vshrl.u32 %v800, 7
        %v802 = vsub.s32 1, %v801
        %v803 = vrot.slane %v640, %v802
        %v804 = vmul.f32 %v796, %v803
        %v805 = vmul.f32 %v797, %v803
        %v806 = vmul.f32 %v798, %v803
        %v807 = vmul.f32 %v799, %v803
        %v808 = vlaneseq
        %v809 = vshrl.u32 %v808, 7
        %v810 = vsub.s32 2, %v809
        %v811 = vrot.slane %v640, %v810
        %v812 = vadd.f32 %v804, %v811
        %v813 = vadd.f32 %v805, %v811
        %v814 = vadd.f32 %v806, %v811
        %v815 = vadd.f32 %v807, %v811
        %816 = vst.msk [vmem:[%s217] sm:$0xff] %vm338, %v812
        %817 = vst.msk [vmem:[%s217 + $0x8] sm:$0xff] %vm338, %v813
        %818 = vst.msk [vmem:[%s217 + $0x10] sm:$0xff] %vm338, %v814
        %819 = vst.msk [vmem:[%s217 + $0x18] sm:$0xff] %vm338, %v815
        %s820 = sand.u32 %s137, 1
        %s821 = scalar_lea.sflag [#allocation3], %s820
        %s822 = sand.u32 %s137, 1
        %s823 = smul.addr %s822, 32
        %s824 = scalar_lea.vmem [#allocation2], %s823
        // Predicated region
        $region41: #{tpu_custom_call.1} parent=39 // pred_check
          %p825 = pneg %p147
        $region42: #{tpu_custom_call.1} parent=39 // pred_check_branch
          %827 = sbr.rel (%p825) target = $region44
        $region43: #{tpu_custom_call.1} parent=39 // pred_region
          %s829 = ssub.s32 512, 512
          %830 = vsyncadd %s821, %s829
          %s831 = smul.addr %s19, 4
          %s832 = smul.addr %s831, 128
          %s833 = scalar_lea.hbm %s5, %s832
          %s834 = sshll.u32 %s824, 4
          %s835 = int_to_ptr.vmem [resolvable:$true] %s834
          %840 = dma.vmem_to_hbm [thread:$0]  %s835, 512, %s833, %s821, 128, 128, 8
        $region44: #{tpu_custom_call.1} parent=39 // pred_fallthru
          _
      $region40: #{tpu_custom_call.1} parent=5 // pred_fallthru
        _
      %p841 = scmp.le.s32.totalorder 2, %s14
      // Predicated region
      $region45: #{tpu_custom_call.1} parent=5 // pred_check
        %p842 = pneg %p841
      $region46: #{tpu_custom_call.1} parent=5 // pred_check_branch
        %844 = sbr.rel (%p842) target = $region48
      $region47: #{tpu_custom_call.1} parent=5 // pred_region
        %s845 = ssub.s32 %s14, 2
        // Predicated region
        $region49: #{tpu_custom_call.1} parent=47 // pred_check
          %p846 = pneg %p153
        $region50: #{tpu_custom_call.1} parent=47 // pred_check_branch
          %848 = sbr.rel (%p846) target = $region52
        $region51: #{tpu_custom_call.1} parent=47 // pred_region
          %s849 = sand.u32 %s138, 1
          %s850 = scalar_lea.sflag [#allocation3], %s849
          %s851 = sand.u32 %s138, 1
          %s852 = smul.addr %s851, 32
          %s853 = scalar_lea.vmem [#allocation2], %s852
          %854 = dma.done %s850, 512
        $region52: #{tpu_custom_call.1} parent=47 // pred_fallthru
          _
      $region48: #{tpu_custom_call.1} parent=5 // pred_fallthru
        _
    $region6: #{tpu_custom_call.1} parent=1 // loop_footer
      %s18 = sadd.s32 1, %s14
    $region7: #{tpu_custom_call.1} parent=1 // loop_footer_branch
      %13 = sbr.rel target = $region3
    $region8: #{tpu_custom_call.1} parent=1 // loop_exit
      _
    %855 = vsyncpa [#allocation3], 1
    %s856 = scalar_lea.sflag [#allocation3], 1
    %857 = vsyncpa %s856, 1

</llo_original>
